<compile_context>
chip_gen: v6e
topology: v6e:2x2x1
jax: 0.10.0
libtpu: 0.0.40
codegen_flags: <defaults>
</compile_context>

<pallas_src>
import jax
import jax.numpy as jnp
from jax.experimental import pallas as pl

EMB_IN = 768  # BERT-style embedding width feeding the diminisher


# ---------------------------------------------------------------------------
# Single fused kernel: diminisher + Bi-LSTM(lstm_out[0]) + head + log_softmax
# ---------------------------------------------------------------------------
def _make_fused_kernel(T, B):
    def kernel(e_ref, wd_ref, bd_ref,
               wih_f_ref, whh_f_ref, bf_ref,
               wih_b_ref, whh_b_ref, bb_ref,
               wo_ref, bo_ref, o_ref):
        H = whh_b_ref.shape[0]

        # --- Diminisher Linear(768 -> E) on all T*B tokens in ONE MXU matmul.
        # bf16 operands / f32 accumulation (native on v6e/v7x MXU, fine on v5e).
        x = (jnp.dot(e_ref[...].astype(jnp.bfloat16),
                     wd_ref[...].astype(jnp.bfloat16),
                     preferred_element_type=jnp.float32)
             + bd_ref[...])                                        # (T*B, E) f32

        # --- Forward direction: lstm_out[0] needs exactly one cell step with
        # h0 = c0 = 0, so h@W_hh and the f*c term are identically zero.
        # PyTorch gate order: i, f, g, o ; biases (b_ih + b_hh) pre-summed.
        g_f = (jnp.dot(x[0:B], wih_f_ref[...],
                       preferred_element_type=jnp.float32) + bf_ref[...])
        i_f = jax.nn.sigmoid(g_f[:, 0 * H:1 * H])
        gg_f = jnp.tanh(g_f[:, 2 * H:3 * H])
        o_f = jax.nn.sigmoid(g_f[:, 3 * H:4 * H])
        h_fwd = o_f * jnp.tanh(i_f * gg_f)

        # --- Backward direction: hoist x@W_ih for all T steps into one
        # parallel matmul; the recurrence keeps only h@W_hh + gates + bias.
        gate_x = (jnp.dot(x, wih_b_ref[...],
                          preferred_element_type=jnp.float32)
                  + bb_ref[...])                                   # (T*B, 4H)

        # First reverse step (t = T-1), specialized for h0 = c0 = 0.
        g0 = gate_x[(T - 1) * B:T * B]
        c = jax.nn.sigmoid(g0[:, 0 * H:1 * H]) * jnp.tanh(g0[:, 2 * H:3 * H])
        h = jax.nn.sigmoid(g0[:, 3 * H:4 * H]) * jnp.tanh(c)

        # Remaining reverse steps t = T-2 .. 0, fully unrolled (T static).
        for t in range(T - 2, -1, -1):
            g = (gate_x[t * B:(t + 1) * B]
                 + jnp.dot(h, whh_b_ref[...],
                           preferred_element_type=jnp.float32))
            i = jax.nn.sigmoid(g[:, 0 * H:1 * H])
            f = jax.nn.sigmoid(g[:, 1 * H:2 * H])
            gg = jnp.tanh(g[:, 2 * H:3 * H])
            o = jax.nn.sigmoid(g[:, 3 * H:4 * H])
            c = f * c + i * gg
            h = o * jnp.tanh(c)
        h_bwd = h

        # --- hidden2tag on concat(h_fwd, h_bwd): two split matmuls (avoids a
        # lane-dim concatenate; mathematically identical), then log_softmax.
        tag = (jnp.dot(h_fwd, wo_ref[0:H, :], preferred_element_type=jnp.float32)
               + jnp.dot(h_bwd, wo_ref[H:2 * H, :], preferred_element_type=jnp.float32)
               + bo_ref[...])
        m = jnp.max(tag, axis=1, keepdims=True)
        z = tag - m
        o_ref[...] = z - jnp.log(jnp.sum(jnp.exp(z), axis=1, keepdims=True))

    return kernel


# ---------------------------------------------------------------------------
# Wrapper
# ---------------------------------------------------------------------------
def classifier_forward(embeds, params):
    T, B, F = embeds.shape
    C = params["wo"].shape[1]
    e2d = embeds.reshape(T * B, F)   # contiguous metadata reshape, no copy
    return pl.pallas_call(
        _make_fused_kernel(T, B),
        out_shape=jax.ShapeDtypeStruct((B, C), jnp.float32),
    )(e2d, params["wd"], params["bd"],
      params["wih_f"], params["whh_f"], params["b_f"],
      params["wih_b"], params["whh_b"], params["b_b"],
      params["wo"], params["bo"])


# ---------------------------------------------------------------------------
# Pure-JAX reference (replicates the full PyTorch forward in f32, including
# the complete bidirectional LSTM, then takes lstm_out[0]).
# ---------------------------------------------------------------------------
def ref_forward(embeds, p):
    x = embeds @ p["wd"] + p["bd"]  # (T, B, E)
    T, B, _ = x.shape
    H = p["whh_f"].shape[0]

    def cell(xt, h, c, wih, whh, b):
        g = xt @ wih + h @ whh + b
        i = jax.nn.sigmoid(g[:, :H])
        f = jax.nn.sigmoid(g[:, H:2 * H])
        gg = jnp.tanh(g[:, 2 * H:3 * H])
        o = jax.nn.sigmoid(g[:, 3 * H:])
        c = f * c + i * gg
        h = o * jnp.tanh(c)
        return h, c

    h = jnp.zeros((B, H)); c = jnp.zeros((B, H))
    fwd = []
    for t in range(T):
        h, c = cell(x[t], h, c, p["wih_f"], p["whh_f"], p["b_f"])
        fwd.append(h)
    h = jnp.zeros((B, H)); c = jnp.zeros((B, H))
    bwd = [None] * T
    for t in range(T - 1, -1, -1):
        h, c = cell(x[t], h, c, p["wih_b"], p["whh_b"], p["b_b"])
        bwd[t] = h
    lstm0 = jnp.concatenate([fwd[0], bwd[0]], axis=1)
    tag = lstm0 @ p["wo"] + p["bo"]
    return jax.nn.log_softmax(tag, axis=1)


def init_params(key, emb_dim, lstm_out_dim, num_classes):
    E, H, C = emb_dim, lstm_out_dim, num_classes
    ks = jax.random.split(key, 10)
    s = 0.05
    return {
        # diminisher: Linear(768, E)  -> stored as (768, E), bias (1, E)
        "wd": s * jax.random.normal(ks[0], (EMB_IN, E), jnp.float32),
        "bd": s * jax.random.normal(ks[1], (1, E), jnp.float32),
        # forward LSTM direction: W_ih (E, 4H), W_hh (H, 4H), bias (1, 4H) = b_ih + b_hh
        "wih_f": s * jax.random.normal(ks[2], (E, 4 * H), jnp.float32),
        "whh_f": s * jax.random.normal(ks[3], (H, 4 * H), jnp.float32),
        "b_f": s * jax.random.normal(ks[4], (1, 4 * H), jnp.float32),
        # backward LSTM direction
        "wih_b": s * jax.random.normal(ks[5], (E, 4 * H), jnp.float32),
        "whh_b": s * jax.random.normal(ks[6], (H, 4 * H), jnp.float32),
        "b_b": s * jax.random.normal(ks[7], (1, 4 * H), jnp.float32),
        # hidden2tag: Linear(2H, C) -> stored as (2H, C), bias (1, C)
        "wo": s * jax.random.normal(ks[8], (2 * H, C), jnp.float32),
        "bo": s * jax.random.normal(ks[9], (1, C), jnp.float32),
    }


if __name__ == "__main__":
    T, B = 8, 2              # |Token| x |Batch|
    emb_dim = 32             # diminisher output
    lstm_out_dim = 32        # Bi-LSTM hidden size
    num_classes = 2

    key = jax.random.PRNGKey(0)
    k_in, k_par = jax.random.split(key)
    embeds = jax.random.normal(k_in, (T, B, EMB_IN), jnp.float32)
    params = init_params(k_par, emb_dim, lstm_out_dim, num_classes)

    out = classifier_forward(embeds, params)
    out = jax.block_until_ready(out)

    ref = ref_forward(embeds, params)
    assert out.shape == (B, num_classes)
    # Kernel uses bf16 MXU inputs (f32 accumulation) only for the 768-deep
    # diminisher matmul; reference is all-f32, so tolerance is relaxed.
    assert jnp.allclose(out, ref, atol=1e-2, rtol=1e-2), (out, ref)

    print("KERNEL_OK")
</pallas_src>

<mosaic_0001>
module attributes {stable_mosaic.version = 11 : i64} {
  func.func @kernel(%arg0: memref<16x768xf32, #tpu.memory_space<vmem>>, %arg1: memref<768x32xf32, #tpu.memory_space<vmem>>, %arg2: memref<1x32xf32, #tpu.memory_space<vmem>>, %arg3: memref<32x128xf32, #tpu.memory_space<vmem>>, %arg4: memref<32x128xf32, #tpu.memory_space<vmem>>, %arg5: memref<1x128xf32, #tpu.memory_space<vmem>>, %arg6: memref<32x128xf32, #tpu.memory_space<vmem>>, %arg7: memref<32x128xf32, #tpu.memory_space<vmem>>, %arg8: memref<1x128xf32, #tpu.memory_space<vmem>>, %arg9: memref<64x2xf32, #tpu.memory_space<vmem>>, %arg10: memref<1x2xf32, #tpu.memory_space<vmem>>, %arg11: memref<2x2xf32, #tpu.memory_space<vmem>>) attributes {dimension_semantics = [], scalar_prefetch = 0 : i64, scratch_operands = 0 : i64, tpu.core_type = #tpu.core_type<tc>} {
    %c0 = arith.constant 0 : index
    %c0_0 = arith.constant 0 : index
    %0 = vector.load %arg0[%c0, %c0_0] : memref<16x768xf32, #tpu.memory_space<vmem>>, vector<16x768xf32>
    %1 = arith.truncf %0 : vector<16x768xf32> to vector<16x768xbf16>
    %c0_1 = arith.constant 0 : index
    %c0_2 = arith.constant 0 : index
    %2 = vector.load %arg1[%c0_1, %c0_2] : memref<768x32xf32, #tpu.memory_space<vmem>>, vector<768x32xf32>
    %3 = arith.truncf %2 : vector<768x32xf32> to vector<768x32xbf16>
    %cst = arith.constant dense<0.000000e+00> : vector<16x32xf32>
    %4 = tpu.matmul %1, %3, %cst {dimension_numbers = #tpu.dot_dimension_numbers<[1], [0], [0], [1], [0, 0, 1, 1], [], []>} : vector<16x768xbf16>, vector<768x32xbf16>, vector<16x32xf32> -> vector<16x32xf32>
    %c0_3 = arith.constant 0 : index
    %c0_4 = arith.constant 0 : index
    %5 = vector.load %arg2[%c0_3, %c0_4] : memref<1x32xf32, #tpu.memory_space<vmem>>, vector<1x32xf32>
    %6 = vector.broadcast %5 : vector<1x32xf32> to vector<16x32xf32>
    %7 = arith.addf %4, %6 : vector<16x32xf32>
    %8 = vector.extract_strided_slice %7 {offsets = [0, 0], sizes = [2, 32], strides = [1, 1]} : vector<16x32xf32> to vector<2x32xf32>
    %c0_5 = arith.constant 0 : index
    %c0_6 = arith.constant 0 : index
    %9 = vector.load %arg3[%c0_5, %c0_6] : memref<32x128xf32, #tpu.memory_space<vmem>>, vector<32x128xf32>
    %cst_7 = arith.constant dense<0.000000e+00> : vector<2x128xf32>
    %10 = tpu.matmul %8, %9, %cst_7 {dimension_numbers = #tpu.dot_dimension_numbers<[1], [0], [0], [1], [0, 0, 1, 1], [], []>} : vector<2x32xf32>, vector<32x128xf32>, vector<2x128xf32> -> vector<2x128xf32>
    %c0_8 = arith.constant 0 : index
    %c0_9 = arith.constant 0 : index
    %11 = vector.load %arg5[%c0_8, %c0_9] : memref<1x128xf32, #tpu.memory_space<vmem>>, vector<1x128xf32>
    %12 = vector.broadcast %11 : vector<1x128xf32> to vector<2x128xf32>
    %13 = arith.addf %10, %12 : vector<2x128xf32>
    %14 = vector.extract_strided_slice %13 {offsets = [0, 0], sizes = [2, 32], strides = [1, 1]} : vector<2x128xf32> to vector<2x32xf32>
    %15 = arith.negf %14 : vector<2x32xf32>
    %16 = math.exp %15 : vector<2x32xf32>
    %cst_10 = arith.constant 1.000000e+00 : f32
    %17 = vector.broadcast %cst_10 : f32 to vector<2x32xf32>
    %18 = arith.addf %17, %16 : vector<2x32xf32>
    %19 = arith.divf %17, %18 : vector<2x32xf32>
    %20 = vector.extract_strided_slice %13 {offsets = [0, 64], sizes = [2, 32], strides = [1, 1]} : vector<2x128xf32> to vector<2x32xf32>
    %21 = math.tanh %20 : vector<2x32xf32>
    %22 = vector.extract_strided_slice %13 {offsets = [0, 96], sizes = [2, 32], strides = [1, 1]} : vector<2x128xf32> to vector<2x32xf32>
    %23 = arith.negf %22 : vector<2x32xf32>
    %24 = math.exp %23 : vector<2x32xf32>
    %cst_11 = arith.constant 1.000000e+00 : f32
    %25 = vector.broadcast %cst_11 : f32 to vector<2x32xf32>
    %26 = arith.addf %25, %24 : vector<2x32xf32>
    %27 = arith.divf %25, %26 : vector<2x32xf32>
    %28 = arith.mulf %19, %21 : vector<2x32xf32>
    %29 = math.tanh %28 : vector<2x32xf32>
    %30 = arith.mulf %27, %29 : vector<2x32xf32>
    %c0_12 = arith.constant 0 : index
    %c0_13 = arith.constant 0 : index
    %31 = vector.load %arg6[%c0_12, %c0_13] : memref<32x128xf32, #tpu.memory_space<vmem>>, vector<32x128xf32>
    %cst_14 = arith.constant dense<0.000000e+00> : vector<16x128xf32>
    %32 = tpu.matmul %7, %31, %cst_14 {dimension_numbers = #tpu.dot_dimension_numbers<[1], [0], [0], [1], [0, 0, 1, 1], [], []>} : vector<16x32xf32>, vector<32x128xf32>, vector<16x128xf32> -> vector<16x128xf32>
    %c0_15 = arith.constant 0 : index
    %c0_16 = arith.constant 0 : index
    %33 = vector.load %arg8[%c0_15, %c0_16] : memref<1x128xf32, #tpu.memory_space<vmem>>, vector<1x128xf32>
    %34 = vector.broadcast %33 : vector<1x128xf32> to vector<16x128xf32>
    %35 = arith.addf %32, %34 : vector<16x128xf32>
    %36 = vector.extract_strided_slice %35 {offsets = [14, 0], sizes = [2, 128], strides = [1, 1]} : vector<16x128xf32> to vector<2x128xf32>
    %37 = vector.extract_strided_slice %36 {offsets = [0, 0], sizes = [2, 32], strides = [1, 1]} : vector<2x128xf32> to vector<2x32xf32>
    %38 = arith.negf %37 : vector<2x32xf32>
    %39 = math.exp %38 : vector<2x32xf32>
    %cst_17 = arith.constant 1.000000e+00 : f32
    %40 = vector.broadcast %cst_17 : f32 to vector<2x32xf32>
    %41 = arith.addf %40, %39 : vector<2x32xf32>
    %42 = arith.divf %40, %41 : vector<2x32xf32>
    %43 = vector.extract_strided_slice %36 {offsets = [0, 64], sizes = [2, 32], strides = [1, 1]} : vector<2x128xf32> to vector<2x32xf32>
    %44 = math.tanh %43 : vector<2x32xf32>
    %45 = arith.mulf %42, %44 : vector<2x32xf32>
    %46 = vector.extract_strided_slice %36 {offsets = [0, 96], sizes = [2, 32], strides = [1, 1]} : vector<2x128xf32> to vector<2x32xf32>
    %47 = arith.negf %46 : vector<2x32xf32>
    %48 = math.exp %47 : vector<2x32xf32>
    %cst_18 = arith.constant 1.000000e+00 : f32
    %49 = vector.broadcast %cst_18 : f32 to vector<2x32xf32>
    %50 = arith.addf %49, %48 : vector<2x32xf32>
    %51 = arith.divf %49, %50 : vector<2x32xf32>
    %52 = math.tanh %45 : vector<2x32xf32>
    %53 = arith.mulf %51, %52 : vector<2x32xf32>
    %54 = vector.extract_strided_slice %35 {offsets = [12, 0], sizes = [2, 128], strides = [1, 1]} : vector<16x128xf32> to vector<2x128xf32>
    %c0_19 = arith.constant 0 : index
    %c0_20 = arith.constant 0 : index
    %55 = vector.load %arg7[%c0_19, %c0_20] : memref<32x128xf32, #tpu.memory_space<vmem>>, vector<32x128xf32>
    %cst_21 = arith.constant dense<0.000000e+00> : vector<2x128xf32>
    %56 = tpu.matmul %53, %55, %cst_21 {dimension_numbers = #tpu.dot_dimension_numbers<[1], [0], [0], [1], [0, 0, 1, 1], [], []>} : vector<2x32xf32>, vector<32x128xf32>, vector<2x128xf32> -> vector<2x128xf32>
    %57 = arith.addf %54, %56 : vector<2x128xf32>
    %58 = vector.extract_strided_slice %57 {offsets = [0, 0], sizes = [2, 32], strides = [1, 1]} : vector<2x128xf32> to vector<2x32xf32>
    %59 = arith.negf %58 : vector<2x32xf32>
    %60 = math.exp %59 : vector<2x32xf32>
    %cst_22 = arith.constant 1.000000e+00 : f32
    %61 = vector.broadcast %cst_22 : f32 to vector<2x32xf32>
    %62 = arith.addf %61, %60 : vector<2x32xf32>
    %63 = arith.divf %61, %62 : vector<2x32xf32>
    %64 = vector.extract_strided_slice %57 {offsets = [0, 32], sizes = [2, 32], strides = [1, 1]} : vector<2x128xf32> to vector<2x32xf32>
    %65 = arith.negf %64 : vector<2x32xf32>
    %66 = math.exp %65 : vector<2x32xf32>
    %cst_23 = arith.constant 1.000000e+00 : f32
    %67 = vector.broadcast %cst_23 : f32 to vector<2x32xf32>
    %68 = arith.addf %67, %66 : vector<2x32xf32>
    %69 = arith.divf %67, %68 : vector<2x32xf32>
    %70 = vector.extract_strided_slice %57 {offsets = [0, 64], sizes = [2, 32], strides = [1, 1]} : vector<2x128xf32> to vector<2x32xf32>
    %71 = math.tanh %70 : vector<2x32xf32>
    %72 = vector.extract_strided_slice %57 {offsets = [0, 96], sizes = [2, 32], strides = [1, 1]} : vector<2x128xf32> to vector<2x32xf32>
    %73 = arith.negf %72 : vector<2x32xf32>
    %74 = math.exp %73 : vector<2x32xf32>
    %cst_24 = arith.constant 1.000000e+00 : f32
    %75 = vector.broadcast %cst_24 : f32 to vector<2x32xf32>
    %76 = arith.addf %75, %74 : vector<2x32xf32>
    %77 = arith.divf %75, %76 : vector<2x32xf32>
    %78 = arith.mulf %69, %45 : vector<2x32xf32>
    %79 = arith.mulf %63, %71 : vector<2x32xf32>
    %80 = arith.addf %78, %79 : vector<2x32xf32>
    %81 = math.tanh %80 : vector<2x32xf32>
    %82 = arith.mulf %77, %81 : vector<2x32xf32>
    %83 = vector.extract_strided_slice %35 {offsets = [10, 0], sizes = [2, 128], strides = [1, 1]} : vector<16x128xf32> to vector<2x128xf32>
    %c0_25 = arith.constant 0 : index
    %c0_26 = arith.constant 0 : index
    %84 = vector.load %arg7[%c0_25, %c0_26] : memref<32x128xf32, #tpu.memory_space<vmem>>, vector<32x128xf32>
    %cst_27 = arith.constant dense<0.000000e+00> : vector<2x128xf32>
    %85 = tpu.matmul %82, %84, %cst_27 {dimension_numbers = #tpu.dot_dimension_numbers<[1], [0], [0], [1], [0, 0, 1, 1], [], []>} : vector<2x32xf32>, vector<32x128xf32>, vector<2x128xf32> -> vector<2x128xf32>
    %86 = arith.addf %83, %85 : vector<2x128xf32>
    %87 = vector.extract_strided_slice %86 {offsets = [0, 0], sizes = [2, 32], strides = [1, 1]} : vector<2x128xf32> to vector<2x32xf32>
    %88 = arith.negf %87 : vector<2x32xf32>
    %89 = math.exp %88 : vector<2x32xf32>
    %cst_28 = arith.constant 1.000000e+00 : f32
    %90 = vector.broadcast %cst_28 : f32 to vector<2x32xf32>
    %91 = arith.addf %90, %89 : vector<2x32xf32>
    %92 = arith.divf %90, %91 : vector<2x32xf32>
    %93 = vector.extract_strided_slice %86 {offsets = [0, 32], sizes = [2, 32], strides = [1, 1]} : vector<2x128xf32> to vector<2x32xf32>
    %94 = arith.negf %93 : vector<2x32xf32>
    %95 = math.exp %94 : vector<2x32xf32>
    %cst_29 = arith.constant 1.000000e+00 : f32
    %96 = vector.broadcast %cst_29 : f32 to vector<2x32xf32>
    %97 = arith.addf %96, %95 : vector<2x32xf32>
    %98 = arith.divf %96, %97 : vector<2x32xf32>
    %99 = vector.extract_strided_slice %86 {offsets = [0, 64], sizes = [2, 32], strides = [1, 1]} : vector<2x128xf32> to vector<2x32xf32>
    %100 = math.tanh %99 : vector<2x32xf32>
    %101 = vector.extract_strided_slice %86 {offsets = [0, 96], sizes = [2, 32], strides = [1, 1]} : vector<2x128xf32> to vector<2x32xf32>
    %102 = arith.negf %101 : vector<2x32xf32>
    %103 = math.exp %102 : vector<2x32xf32>
    %cst_30 = arith.constant 1.000000e+00 : f32
    %104 = vector.broadcast %cst_30 : f32 to vector<2x32xf32>
    %105 = arith.addf %104, %103 : vector<2x32xf32>
    %106 = arith.divf %104, %105 : vector<2x32xf32>
    %107 = arith.mulf %98, %80 : vector<2x32xf32>
    %108 = arith.mulf %92, %100 : vector<2x32xf32>
    %109 = arith.addf %107, %108 : vector<2x32xf32>
    %110 = math.tanh %109 : vector<2x32xf32>
    %111 = arith.mulf %106, %110 : vector<2x32xf32>
    %112 = vector.extract_strided_slice %35 {offsets = [8, 0], sizes = [2, 128], strides = [1, 1]} : vector<16x128xf32> to vector<2x128xf32>
    %c0_31 = arith.constant 0 : index
    %c0_32 = arith.constant 0 : index
    %113 = vector.load %arg7[%c0_31, %c0_32] : memref<32x128xf32, #tpu.memory_space<vmem>>, vector<32x128xf32>
    %cst_33 = arith.constant dense<0.000000e+00> : vector<2x128xf32>
    %114 = tpu.matmul %111, %113, %cst_33 {dimension_numbers = #tpu.dot_dimension_numbers<[1], [0], [0], [1], [0, 0, 1, 1], [], []>} : vector<2x32xf32>, vector<32x128xf32>, vector<2x128xf32> -> vector<2x128xf32>
    %115 = arith.addf %112, %114 : vector<2x128xf32>
    %116 = vector.extract_strided_slice %115 {offsets = [0, 0], sizes = [2, 32], strides = [1, 1]} : vector<2x128xf32> to vector<2x32xf32>
    %117 = arith.negf %116 : vector<2x32xf32>
    %118 = math.exp %117 : vector<2x32xf32>
    %cst_34 = arith.constant 1.000000e+00 : f32
    %119 = vector.broadcast %cst_34 : f32 to vector<2x32xf32>
    %120 = arith.addf %119, %118 : vector<2x32xf32>
    %121 = arith.divf %119, %120 : vector<2x32xf32>
    %122 = vector.extract_strided_slice %115 {offsets = [0, 32], sizes = [2, 32], strides = [1, 1]} : vector<2x128xf32> to vector<2x32xf32>
    %123 = arith.negf %122 : vector<2x32xf32>
    %124 = math.exp %123 : vector<2x32xf32>
    %cst_35 = arith.constant 1.000000e+00 : f32
    %125 = vector.broadcast %cst_35 : f32 to vector<2x32xf32>
    %126 = arith.addf %125, %124 : vector<2x32xf32>
    %127 = arith.divf %125, %126 : vector<2x32xf32>
    %128 = vector.extract_strided_slice %115 {offsets = [0, 64], sizes = [2, 32], strides = [1, 1]} : vector<2x128xf32> to vector<2x32xf32>
    %129 = math.tanh %128 : vector<2x32xf32>
    %130 = vector.extract_strided_slice %115 {offsets = [0, 96], sizes = [2, 32], strides = [1, 1]} : vector<2x128xf32> to vector<2x32xf32>
    %131 = arith.negf %130 : vector<2x32xf32>
    %132 = math.exp %131 : vector<2x32xf32>
    %cst_36 = arith.constant 1.000000e+00 : f32
    %133 = vector.broadcast %cst_36 : f32 to vector<2x32xf32>
    %134 = arith.addf %133, %132 : vector<2x32xf32>
    %135 = arith.divf %133, %134 : vector<2x32xf32>
    %136 = arith.mulf %127, %109 : vector<2x32xf32>
    %137 = arith.mulf %121, %129 : vector<2x32xf32>
    %138 = arith.addf %136, %137 : vector<2x32xf32>
    %139 = math.tanh %138 : vector<2x32xf32>
    %140 = arith.mulf %135, %139 : vector<2x32xf32>
    %141 = vector.extract_strided_slice %35 {offsets = [6, 0], sizes = [2, 128], strides = [1, 1]} : vector<16x128xf32> to vector<2x128xf32>
    %c0_37 = arith.constant 0 : index
    %c0_38 = arith.constant 0 : index
    %142 = vector.load %arg7[%c0_37, %c0_38] : memref<32x128xf32, #tpu.memory_space<vmem>>, vector<32x128xf32>
    %cst_39 = arith.constant dense<0.000000e+00> : vector<2x128xf32>
    %143 = tpu.matmul %140, %142, %cst_39 {dimension_numbers = #tpu.dot_dimension_numbers<[1], [0], [0], [1], [0, 0, 1, 1], [], []>} : vector<2x32xf32>, vector<32x128xf32>, vector<2x128xf32> -> vector<2x128xf32>
    %144 = arith.addf %141, %143 : vector<2x128xf32>
    %145 = vector.extract_strided_slice %144 {offsets = [0, 0], sizes = [2, 32], strides = [1, 1]} : vector<2x128xf32> to vector<2x32xf32>
    %146 = arith.negf %145 : vector<2x32xf32>
    %147 = math.exp %146 : vector<2x32xf32>
    %cst_40 = arith.constant 1.000000e+00 : f32
    %148 = vector.broadcast %cst_40 : f32 to vector<2x32xf32>
    %149 = arith.addf %148, %147 : vector<2x32xf32>
    %150 = arith.divf %148, %149 : vector<2x32xf32>
    %151 = vector.extract_strided_slice %144 {offsets = [0, 32], sizes = [2, 32], strides = [1, 1]} : vector<2x128xf32> to vector<2x32xf32>
    %152 = arith.negf %151 : vector<2x32xf32>
    %153 = math.exp %152 : vector<2x32xf32>
    %cst_41 = arith.constant 1.000000e+00 : f32
    %154 = vector.broadcast %cst_41 : f32 to vector<2x32xf32>
    %155 = arith.addf %154, %153 : vector<2x32xf32>
    %156 = arith.divf %154, %155 : vector<2x32xf32>
    %157 = vector.extract_strided_slice %144 {offsets = [0, 64], sizes = [2, 32], strides = [1, 1]} : vector<2x128xf32> to vector<2x32xf32>
    %158 = math.tanh %157 : vector<2x32xf32>
    %159 = vector.extract_strided_slice %144 {offsets = [0, 96], sizes = [2, 32], strides = [1, 1]} : vector<2x128xf32> to vector<2x32xf32>
    %160 = arith.negf %159 : vector<2x32xf32>
    %161 = math.exp %160 : vector<2x32xf32>
    %cst_42 = arith.constant 1.000000e+00 : f32
    %162 = vector.broadcast %cst_42 : f32 to vector<2x32xf32>
    %163 = arith.addf %162, %161 : vector<2x32xf32>
    %164 = arith.divf %162, %163 : vector<2x32xf32>
    %165 = arith.mulf %156, %138 : vector<2x32xf32>
    %166 = arith.mulf %150, %158 : vector<2x32xf32>
    %167 = arith.addf %165, %166 : vector<2x32xf32>
    %168 = math.tanh %167 : vector<2x32xf32>
    %169 = arith.mulf %164, %168 : vector<2x32xf32>
    %170 = vector.extract_strided_slice %35 {offsets = [4, 0], sizes = [2, 128], strides = [1, 1]} : vector<16x128xf32> to vector<2x128xf32>
    %c0_43 = arith.constant 0 : index
    %c0_44 = arith.constant 0 : index
    %171 = vector.load %arg7[%c0_43, %c0_44] : memref<32x128xf32, #tpu.memory_space<vmem>>, vector<32x128xf32>
    %cst_45 = arith.constant dense<0.000000e+00> : vector<2x128xf32>
    %172 = tpu.matmul %169, %171, %cst_45 {dimension_numbers = #tpu.dot_dimension_numbers<[1], [0], [0], [1], [0, 0, 1, 1], [], []>} : vector<2x32xf32>, vector<32x128xf32>, vector<2x128xf32> -> vector<2x128xf32>
    %173 = arith.addf %170, %172 : vector<2x128xf32>
    %174 = vector.extract_strided_slice %173 {offsets = [0, 0], sizes = [2, 32], strides = [1, 1]} : vector<2x128xf32> to vector<2x32xf32>
    %175 = arith.negf %174 : vector<2x32xf32>
    %176 = math.exp %175 : vector<2x32xf32>
    %cst_46 = arith.constant 1.000000e+00 : f32
    %177 = vector.broadcast %cst_46 : f32 to vector<2x32xf32>
    %178 = arith.addf %177, %176 : vector<2x32xf32>
    %179 = arith.divf %177, %178 : vector<2x32xf32>
    %180 = vector.extract_strided_slice %173 {offsets = [0, 32], sizes = [2, 32], strides = [1, 1]} : vector<2x128xf32> to vector<2x32xf32>
    %181 = arith.negf %180 : vector<2x32xf32>
    %182 = math.exp %181 : vector<2x32xf32>
    %cst_47 = arith.constant 1.000000e+00 : f32
    %183 = vector.broadcast %cst_47 : f32 to vector<2x32xf32>
    %184 = arith.addf %183, %182 : vector<2x32xf32>
    %185 = arith.divf %183, %184 : vector<2x32xf32>
    %186 = vector.extract_strided_slice %173 {offsets = [0, 64], sizes = [2, 32], strides = [1, 1]} : vector<2x128xf32> to vector<2x32xf32>
    %187 = math.tanh %186 : vector<2x32xf32>
    %188 = vector.extract_strided_slice %173 {offsets = [0, 96], sizes = [2, 32], strides = [1, 1]} : vector<2x128xf32> to vector<2x32xf32>
    %189 = arith.negf %188 : vector<2x32xf32>
    %190 = math.exp %189 : vector<2x32xf32>
    %cst_48 = arith.constant 1.000000e+00 : f32
    %191 = vector.broadcast %cst_48 : f32 to vector<2x32xf32>
    %192 = arith.addf %191, %190 : vector<2x32xf32>
    %193 = arith.divf %191, %192 : vector<2x32xf32>
    %194 = arith.mulf %185, %167 : vector<2x32xf32>
    %195 = arith.mulf %179, %187 : vector<2x32xf32>
    %196 = arith.addf %194, %195 : vector<2x32xf32>
    %197 = math.tanh %196 : vector<2x32xf32>
    %198 = arith.mulf %193, %197 : vector<2x32xf32>
    %199 = vector.extract_strided_slice %35 {offsets = [2, 0], sizes = [2, 128], strides = [1, 1]} : vector<16x128xf32> to vector<2x128xf32>
    %c0_49 = arith.constant 0 : index
    %c0_50 = arith.constant 0 : index
    %200 = vector.load %arg7[%c0_49, %c0_50] : memref<32x128xf32, #tpu.memory_space<vmem>>, vector<32x128xf32>
    %cst_51 = arith.constant dense<0.000000e+00> : vector<2x128xf32>
    %201 = tpu.matmul %198, %200, %cst_51 {dimension_numbers = #tpu.dot_dimension_numbers<[1], [0], [0], [1], [0, 0, 1, 1], [], []>} : vector<2x32xf32>, vector<32x128xf32>, vector<2x128xf32> -> vector<2x128xf32>
    %202 = arith.addf %199, %201 : vector<2x128xf32>
    %203 = vector.extract_strided_slice %202 {offsets = [0, 0], sizes = [2, 32], strides = [1, 1]} : vector<2x128xf32> to vector<2x32xf32>
    %204 = arith.negf %203 : vector<2x32xf32>
    %205 = math.exp %204 : vector<2x32xf32>
    %cst_52 = arith.constant 1.000000e+00 : f32
    %206 = vector.broadcast %cst_52 : f32 to vector<2x32xf32>
    %207 = arith.addf %206, %205 : vector<2x32xf32>
    %208 = arith.divf %206, %207 : vector<2x32xf32>
    %209 = vector.extract_strided_slice %202 {offsets = [0, 32], sizes = [2, 32], strides = [1, 1]} : vector<2x128xf32> to vector<2x32xf32>
    %210 = arith.negf %209 : vector<2x32xf32>
    %211 = math.exp %210 : vector<2x32xf32>
    %cst_53 = arith.constant 1.000000e+00 : f32
    %212 = vector.broadcast %cst_53 : f32 to vector<2x32xf32>
    %213 = arith.addf %212, %211 : vector<2x32xf32>
    %214 = arith.divf %212, %213 : vector<2x32xf32>
    %215 = vector.extract_strided_slice %202 {offsets = [0, 64], sizes = [2, 32], strides = [1, 1]} : vector<2x128xf32> to vector<2x32xf32>
    %216 = math.tanh %215 : vector<2x32xf32>
    %217 = vector.extract_strided_slice %202 {offsets = [0, 96], sizes = [2, 32], strides = [1, 1]} : vector<2x128xf32> to vector<2x32xf32>
    %218 = arith.negf %217 : vector<2x32xf32>
    %219 = math.exp %218 : vector<2x32xf32>
    %cst_54 = arith.constant 1.000000e+00 : f32
    %220 = vector.broadcast %cst_54 : f32 to vector<2x32xf32>
    %221 = arith.addf %220, %219 : vector<2x32xf32>
    %222 = arith.divf %220, %221 : vector<2x32xf32>
    %223 = arith.mulf %214, %196 : vector<2x32xf32>
    %224 = arith.mulf %208, %216 : vector<2x32xf32>
    %225 = arith.addf %223, %224 : vector<2x32xf32>
    %226 = math.tanh %225 : vector<2x32xf32>
    %227 = arith.mulf %222, %226 : vector<2x32xf32>
    %228 = vector.extract_strided_slice %35 {offsets = [0, 0], sizes = [2, 128], strides = [1, 1]} : vector<16x128xf32> to vector<2x128xf32>
    %c0_55 = arith.constant 0 : index
    %c0_56 = arith.constant 0 : index
    %229 = vector.load %arg7[%c0_55, %c0_56] : memref<32x128xf32, #tpu.memory_space<vmem>>, vector<32x128xf32>
    %cst_57 = arith.constant dense<0.000000e+00> : vector<2x128xf32>
    %230 = tpu.matmul %227, %229, %cst_57 {dimension_numbers = #tpu.dot_dimension_numbers<[1], [0], [0], [1], [0, 0, 1, 1], [], []>} : vector<2x32xf32>, vector<32x128xf32>, vector<2x128xf32> -> vector<2x128xf32>
    %231 = arith.addf %228, %230 : vector<2x128xf32>
    %232 = vector.extract_strided_slice %231 {offsets = [0, 0], sizes = [2, 32], strides = [1, 1]} : vector<2x128xf32> to vector<2x32xf32>
    %233 = arith.negf %232 : vector<2x32xf32>
    %234 = math.exp %233 : vector<2x32xf32>
    %cst_58 = arith.constant 1.000000e+00 : f32
    %235 = vector.broadcast %cst_58 : f32 to vector<2x32xf32>
    %236 = arith.addf %235, %234 : vector<2x32xf32>
    %237 = arith.divf %235, %236 : vector<2x32xf32>
    %238 = vector.extract_strided_slice %231 {offsets = [0, 32], sizes = [2, 32], strides = [1, 1]} : vector<2x128xf32> to vector<2x32xf32>
    %239 = arith.negf %238 : vector<2x32xf32>
    %240 = math.exp %239 : vector<2x32xf32>
    %cst_59 = arith.constant 1.000000e+00 : f32
    %241 = vector.broadcast %cst_59 : f32 to vector<2x32xf32>
    %242 = arith.addf %241, %240 : vector<2x32xf32>
    %243 = arith.divf %241, %242 : vector<2x32xf32>
    %244 = vector.extract_strided_slice %231 {offsets = [0, 64], sizes = [2, 32], strides = [1, 1]} : vector<2x128xf32> to vector<2x32xf32>
    %245 = math.tanh %244 : vector<2x32xf32>
    %246 = vector.extract_strided_slice %231 {offsets = [0, 96], sizes = [2, 32], strides = [1, 1]} : vector<2x128xf32> to vector<2x32xf32>
    %247 = arith.negf %246 : vector<2x32xf32>
    %248 = math.exp %247 : vector<2x32xf32>
    %cst_60 = arith.constant 1.000000e+00 : f32
    %249 = vector.broadcast %cst_60 : f32 to vector<2x32xf32>
    %250 = arith.addf %249, %248 : vector<2x32xf32>
    %251 = arith.divf %249, %250 : vector<2x32xf32>
    %252 = arith.mulf %243, %225 : vector<2x32xf32>
    %253 = arith.mulf %237, %245 : vector<2x32xf32>
    %254 = arith.addf %252, %253 : vector<2x32xf32>
    %255 = math.tanh %254 : vector<2x32xf32>
    %256 = arith.mulf %251, %255 : vector<2x32xf32>
    %c0_61 = arith.constant 0 : index
    %c0_62 = arith.constant 0 : index
    %257 = vector.load %arg9[%c0_61, %c0_62] : memref<64x2xf32, #tpu.memory_space<vmem>>, vector<32x2xf32>
    %cst_63 = arith.constant dense<0.000000e+00> : vector<2x2xf32>
    %258 = tpu.matmul %30, %257, %cst_63 {dimension_numbers = #tpu.dot_dimension_numbers<[1], [0], [0], [1], [0, 0, 1, 1], [], []>} : vector<2x32xf32>, vector<32x2xf32>, vector<2x2xf32> -> vector<2x2xf32>
    %c32 = arith.constant 32 : index
    %c0_64 = arith.constant 0 : index
    %259 = vector.load %arg9[%c32, %c0_64] : memref<64x2xf32, #tpu.memory_space<vmem>>, vector<32x2xf32>
    %cst_65 = arith.constant dense<0.000000e+00> : vector<2x2xf32>
    %260 = tpu.matmul %256, %259, %cst_65 {dimension_numbers = #tpu.dot_dimension_numbers<[1], [0], [0], [1], [0, 0, 1, 1], [], []>} : vector<2x32xf32>, vector<32x2xf32>, vector<2x2xf32> -> vector<2x2xf32>
    %261 = arith.addf %258, %260 : vector<2x2xf32>
    %c0_66 = arith.constant 0 : index
    %c0_67 = arith.constant 0 : index
    %262 = vector.load %arg10[%c0_66, %c0_67] : memref<1x2xf32, #tpu.memory_space<vmem>>, vector<1x2xf32>
    %263 = vector.broadcast %262 : vector<1x2xf32> to vector<2x2xf32>
    %264 = arith.addf %261, %263 : vector<2x2xf32>
    %cst_68 = arith.constant dense<0xFF800000> : vector<2xf32>
    %265 = vector.multi_reduction <maximumf>, %264, %cst_68 [1] : vector<2x2xf32> to vector<2xf32>
    %266 = vector.shape_cast %265 : vector<2xf32> to vector<2x1xf32>
    %267 = vector.broadcast %266 : vector<2x1xf32> to vector<2x2xf32>
    %268 = arith.subf %264, %267 : vector<2x2xf32>
    %269 = math.exp %268 : vector<2x2xf32>
    %cst_69 = arith.constant dense<0.000000e+00> : vector<2xf32>
    %270 = vector.multi_reduction <add>, %269, %cst_69 [1] : vector<2x2xf32> to vector<2xf32>
    %271 = vector.shape_cast %270 : vector<2xf32> to vector<2x1xf32>
    %272 = math.log %271 : vector<2x1xf32>
    %273 = vector.broadcast %272 : vector<2x1xf32> to vector<2x2xf32>
    %274 = arith.subf %268, %273 : vector<2x2xf32>
    %c0_70 = arith.constant 0 : index
    %c0_71 = arith.constant 0 : index
    %275 = vector.load %arg11[%c0_70, %c0_71] : memref<2x2xf32, #tpu.memory_space<vmem>>, vector<2x2xf32>
    tpu.vector_store %arg11[%c0_70, %c0_71], %274 {strides = array<i32>} : memref<2x2xf32, #tpu.memory_space<vmem>>, vector<2x2xf32>,
    return
  }
}

</mosaic_0001>

<llo_original>
// kernel: tpu_custom_call.1
$region0: #{tpu_custom_call.1}
  #allocation0 [shape = 'u32[]', space=smem, size = 0x4, offset = 0x4, fixed_abs, tag = 'smem constant byte address 0x4 - core index']
  #allocation1 [shape = 'u32[144,128]{1,0:T(1,128)}', space=vmem, size = 0x12000, scoped, tag = 'internal scratch']
  %s0 = inlined_call_operand.vmem [shape: f32[16,768], index: 0, kind: input, shape index: {}]
  %s1 = inlined_call_operand.vmem [shape: f32[768,32], index: 1, kind: input, shape index: {}]
  %s2 = inlined_call_operand.vmem [shape: f32[1,32], index: 2, kind: input, shape index: {}]
  %s3 = inlined_call_operand.vmem [shape: f32[32,128], index: 3, kind: input, shape index: {}]
  %s4 = inlined_call_operand.vmem [shape: f32[32,128], index: 4, kind: input, shape index: {}]
  %s5 = inlined_call_operand.vmem [shape: f32[1,128], index: 5, kind: input, shape index: {}]
  %s6 = inlined_call_operand.vmem [shape: f32[32,128], index: 6, kind: input, shape index: {}]
  %s7 = inlined_call_operand.vmem [shape: f32[32,128], index: 7, kind: input, shape index: {}]
  %s8 = inlined_call_operand.vmem [shape: f32[1,128], index: 8, kind: input, shape index: {}]
  %s9 = inlined_call_operand.vmem [shape: f32[64,2], index: 9, kind: input, shape index: {}]
  %s10 = inlined_call_operand.vmem [shape: f32[1,2], index: 10, kind: input, shape index: {}]
  %s11 = inlined_call_operand.hbm [shape: f32[2,2], index: 11, kind: output, shape index: {}]
  %s12 = sld [smem:[#allocation0]]
  $region54: #{tpu_custom_call.1} parent=0
    _
  %s14 = ssub.s32 1, %s12
  %s15 = scalar_select 0, %s14, %s12
  $region1: #{tpu_custom_call.1} parent=0
    #allocation2 [shape = 'u8[1024]{0}', space=vmem, size = 0x400, scoped, tag = 'output window, operand 0, single buffered']
    #allocation3 [shape = 's32[1]{0}', space=sflag, size = 0x4, scoped, tag = 'scoped memory for tpu_custom_call.1']
    %16 = vsyncpa [#allocation3], 0
    // Predicated region
    $region2: #{tpu_custom_call.1} parent=1 // pred_check
      _
    $region3: #{tpu_custom_call.1} parent=1 // pred_check_branch
      %18 = sbr.rel (0) target = $region5
    $region4: #{tpu_custom_call.1} parent=1 // pred_region
      _
    $region5: #{tpu_custom_call.1} parent=1 // pred_fallthru
      _
    // Predicated region
    $region6: #{tpu_custom_call.1} parent=1 // pred_check
      _
    $region7: #{tpu_custom_call.1} parent=1 // pred_check_branch
      %20 = sbr.rel (0) target = $region9
    $region8: #{tpu_custom_call.1} parent=1 // pred_region
      _
    $region9: #{tpu_custom_call.1} parent=1 // pred_fallthru
      _
    // Predicated region
    $region10: #{tpu_custom_call.1} parent=1 // pred_check
      _
    $region11: #{tpu_custom_call.1} parent=1 // pred_check_branch
      %22 = sbr.rel (0) target = $region13
    $region12: #{tpu_custom_call.1} parent=1 // pred_region
      _
    $region13: #{tpu_custom_call.1} parent=1 // pred_fallthru
      _
    // Predicated region
    $region14: #{tpu_custom_call.1} parent=1 // pred_check
      _
    $region15: #{tpu_custom_call.1} parent=1 // pred_check_branch
      %24 = sbr.rel (0) target = $region17
    $region16: #{tpu_custom_call.1} parent=1 // pred_region
      _
    $region17: #{tpu_custom_call.1} parent=1 // pred_fallthru
      _
    // Predicated region
    $region18: #{tpu_custom_call.1} parent=1 // pred_check
      _
    $region19: #{tpu_custom_call.1} parent=1 // pred_check_branch
      %26 = sbr.rel (0) target = $region21
    $region20: #{tpu_custom_call.1} parent=1 // pred_region
      _
    $region21: #{tpu_custom_call.1} parent=1 // pred_fallthru
      _
    // Predicated region
    $region22: #{tpu_custom_call.1} parent=1 // pred_check
      _
    $region23: #{tpu_custom_call.1} parent=1 // pred_check_branch
      %28 = sbr.rel (0) target = $region25
    $region24: #{tpu_custom_call.1} parent=1 // pred_region
      _
    $region25: #{tpu_custom_call.1} parent=1 // pred_fallthru
      _
    // Predicated region
    $region26: #{tpu_custom_call.1} parent=1 // pred_check
      _
    $region27: #{tpu_custom_call.1} parent=1 // pred_check_branch
      %30 = sbr.rel (0) target = $region29
    $region28: #{tpu_custom_call.1} parent=1 // pred_region
      _
    $region29: #{tpu_custom_call.1} parent=1 // pred_fallthru
      _
    // Predicated region
    $region30: #{tpu_custom_call.1} parent=1 // pred_check
      _
    $region31: #{tpu_custom_call.1} parent=1 // pred_check_branch
      %32 = sbr.rel (0) target = $region33
    $region32: #{tpu_custom_call.1} parent=1 // pred_region
      _
    $region33: #{tpu_custom_call.1} parent=1 // pred_fallthru
      _
    // Predicated region
    $region34: #{tpu_custom_call.1} parent=1 // pred_check
      _
    $region35: #{tpu_custom_call.1} parent=1 // pred_check_branch
      %34 = sbr.rel (0) target = $region37
    $region36: #{tpu_custom_call.1} parent=1 // pred_region
      _
    $region37: #{tpu_custom_call.1} parent=1 // pred_fallthru
      _
    // Predicated region
    $region38: #{tpu_custom_call.1} parent=1 // pred_check
      _
    $region39: #{tpu_custom_call.1} parent=1 // pred_check_branch
      %36 = sbr.rel (0) target = $region41
    $region40: #{tpu_custom_call.1} parent=1 // pred_region
      _
    $region41: #{tpu_custom_call.1} parent=1 // pred_fallthru
      _
    // Predicated region
    $region42: #{tpu_custom_call.1} parent=1 // pred_check
      _
    $region43: #{tpu_custom_call.1} parent=1 // pred_check_branch
      %38 = sbr.rel (0) target = $region45
    $region44: #{tpu_custom_call.1} parent=1 // pred_region
      _
    $region45: #{tpu_custom_call.1} parent=1 // pred_fallthru
      _
    %v40 = vld [vmem:[%s0] sm:$0xff]
    %v41 = vld [vmem:[%s0 + $0x8] sm:$0xff]
    %v42 = vld [vmem:[%s0 + $0x10] sm:$0xff]
    %v43 = vld [vmem:[%s0 + $0x18] sm:$0xff]
    %v44 = vld [vmem:[%s0 + $0x20] sm:$0xff]
    %v45 = vld [vmem:[%s0 + $0x28] sm:$0xff]
    %v46 = vld [vmem:[%s0 + $0x30] sm:$0xff]
    %v47 = vld [vmem:[%s0 + $0x38] sm:$0xff]
    %v48 = vld [vmem:[%s0 + $0x40] sm:$0xff]
    %v49 = vld [vmem:[%s0 + $0x48] sm:$0xff]
    %v50 = vld [vmem:[%s0 + $0x50] sm:$0xff]
    %v51 = vld [vmem:[%s0 + $0x58] sm:$0xff]
    %v52 = vpack.c.bf16 %v46, %v40
    %v53 = vpack.c.bf16 %v47, %v41
    %v54 = vpack.c.bf16 %v48, %v42
    %v55 = vpack.c.bf16 %v49, %v43
    %v56 = vpack.c.bf16 %v50, %v44
    %v57 = vpack.c.bf16 %v51, %v45
    %v58 = vld [vmem:[%s1] sm:$0xff]
    %v59 = vld [vmem:[%s1 + $0x8] sm:$0xff]
    %v60 = vld [vmem:[%s1 + $0x10] sm:$0xff]
    %v61 = vld [vmem:[%s1 + $0x18] sm:$0xff]
    %v62 = vld [vmem:[%s1 + $0x20] sm:$0xff]
    %v63 = vld [vmem:[%s1 + $0x28] sm:$0xff]
    %v64 = vld [vmem:[%s1 + $0x30] sm:$0xff]
    %v65 = vld [vmem:[%s1 + $0x38] sm:$0xff]
    %v66 = vld [vmem:[%s1 + $0x40] sm:$0xff]
    %v67 = vld [vmem:[%s1 + $0x48] sm:$0xff]
    %v68 = vld [vmem:[%s1 + $0x50] sm:$0xff]
    %v69 = vld [vmem:[%s1 + $0x58] sm:$0xff]
    %v70 = vld [vmem:[%s1 + $0x60] sm:$0xff]
    %v71 = vld [vmem:[%s1 + $0x68] sm:$0xff]
    %v72 = vld [vmem:[%s1 + $0x70] sm:$0xff]
    %v73 = vld [vmem:[%s1 + $0x78] sm:$0xff]
    %v74 = vld [vmem:[%s1 + $0x80] sm:$0xff]
    %v75 = vld [vmem:[%s1 + $0x88] sm:$0xff]
    %v76 = vld [vmem:[%s1 + $0x90] sm:$0xff]
    %v77 = vld [vmem:[%s1 + $0x98] sm:$0xff]
    %v78 = vld [vmem:[%s1 + $0xa0] sm:$0xff]
    %v79 = vld [vmem:[%s1 + $0xa8] sm:$0xff]
    %v80 = vld [vmem:[%s1 + $0xb0] sm:$0xff]
    %v81 = vld [vmem:[%s1 + $0xb8] sm:$0xff]
    %v82 = vld [vmem:[%s1 + $0xc0] sm:$0xff]
    %v83 = vld [vmem:[%s1 + $0xc8] sm:$0xff]
    %v84 = vld [vmem:[%s1 + $0xd0] sm:$0xff]
    %v85 = vld [vmem:[%s1 + $0xd8] sm:$0xff]
    %v86 = vld [vmem:[%s1 + $0xe0] sm:$0xff]
    %v87 = vld [vmem:[%s1 + $0xe8] sm:$0xff]
    %v88 = vld [vmem:[%s1 + $0xf0] sm:$0xff]
    %v89 = vld [vmem:[%s1 + $0xf8] sm:$0xff]
    %v90 = vld [vmem:[%s1 + $0x100] sm:$0xff]
    %v91 = vld [vmem:[%s1 + $0x108] sm:$0xff]
    %v92 = vld [vmem:[%s1 + $0x110] sm:$0xff]
    %v93 = vld [vmem:[%s1 + $0x118] sm:$0xff]
    %v94 = vld [vmem:[%s1 + $0x120] sm:$0xff]
    %v95 = vld [vmem:[%s1 + $0x128] sm:$0xff]
    %v96 = vld [vmem:[%s1 + $0x130] sm:$0xff]
    %v97 = vld [vmem:[%s1 + $0x138] sm:$0xff]
    %v98 = vld [vmem:[%s1 + $0x140] sm:$0xff]
    %v99 = vld [vmem:[%s1 + $0x148] sm:$0xff]
    %v100 = vld [vmem:[%s1 + $0x150] sm:$0xff]
    %v101 = vld [vmem:[%s1 + $0x158] sm:$0xff]
    %v102 = vld [vmem:[%s1 + $0x160] sm:$0xff]
    %v103 = vld [vmem:[%s1 + $0x168] sm:$0xff]
    %v104 = vld [vmem:[%s1 + $0x170] sm:$0xff]
    %v105 = vld [vmem:[%s1 + $0x178] sm:$0xff]
    %v106 = vld [vmem:[%s1 + $0x180] sm:$0xff]
    %v107 = vld [vmem:[%s1 + $0x188] sm:$0xff]
    %v108 = vld [vmem:[%s1 + $0x190] sm:$0xff]
    %v109 = vld [vmem:[%s1 + $0x198] sm:$0xff]
    %v110 = vld [vmem:[%s1 + $0x1a0] sm:$0xff]
    %v111 = vld [vmem:[%s1 + $0x1a8] sm:$0xff]
    %v112 = vld [vmem:[%s1 + $0x1b0] sm:$0xff]
    %v113 = vld [vmem:[%s1 + $0x1b8] sm:$0xff]
    %v114 = vld [vmem:[%s1 + $0x1c0] sm:$0xff]
    %v115 = vld [vmem:[%s1 + $0x1c8] sm:$0xff]
    %v116 = vld [vmem:[%s1 + $0x1d0] sm:$0xff]
    %v117 = vld [vmem:[%s1 + $0x1d8] sm:$0xff]
    %v118 = vld [vmem:[%s1 + $0x1e0] sm:$0xff]
    %v119 = vld [vmem:[%s1 + $0x1e8] sm:$0xff]
    %v120 = vld [vmem:[%s1 + $0x1f0] sm:$0xff]
    %v121 = vld [vmem:[%s1 + $0x1f8] sm:$0xff]
    %v122 = vld [vmem:[%s1 + $0x200] sm:$0xff]
    %v123 = vld [vmem:[%s1 + $0x208] sm:$0xff]
    %v124 = vld [vmem:[%s1 + $0x210] sm:$0xff]
    %v125 = vld [vmem:[%s1 + $0x218] sm:$0xff]
    %v126 = vld [vmem:[%s1 + $0x220] sm:$0xff]
    %v127 = vld [vmem:[%s1 + $0x228] sm:$0xff]
    %v128 = vld [vmem:[%s1 + $0x230] sm:$0xff]
    %v129 = vld [vmem:[%s1 + $0x238] sm:$0xff]
    %v130 = vld [vmem:[%s1 + $0x240] sm:$0xff]
    %v131 = vld [vmem:[%s1 + $0x248] sm:$0xff]
    %v132 = vld [vmem:[%s1 + $0x250] sm:$0xff]
    %v133 = vld [vmem:[%s1 + $0x258] sm:$0xff]
    %v134 = vld [vmem:[%s1 + $0x260] sm:$0xff]
    %v135 = vld [vmem:[%s1 + $0x268] sm:$0xff]
    %v136 = vld [vmem:[%s1 + $0x270] sm:$0xff]
    %v137 = vld [vmem:[%s1 + $0x278] sm:$0xff]
    %v138 = vld [vmem:[%s1 + $0x280] sm:$0xff]
    %v139 = vld [vmem:[%s1 + $0x288] sm:$0xff]
    %v140 = vld [vmem:[%s1 + $0x290] sm:$0xff]
    %v141 = vld [vmem:[%s1 + $0x298] sm:$0xff]
    %v142 = vld [vmem:[%s1 + $0x2a0] sm:$0xff]
    %v143 = vld [vmem:[%s1 + $0x2a8] sm:$0xff]
    %v144 = vld [vmem:[%s1 + $0x2b0] sm:$0xff]
    %v145 = vld [vmem:[%s1 + $0x2b8] sm:$0xff]
    %v146 = vld [vmem:[%s1 + $0x2c0] sm:$0xff]
    %v147 = vld [vmem:[%s1 + $0x2c8] sm:$0xff]
    %v148 = vld [vmem:[%s1 + $0x2d0] sm:$0xff]
    %v149 = vld [vmem:[%s1 + $0x2d8] sm:$0xff]
    %v150 = vld [vmem:[%s1 + $0x2e0] sm:$0xff]
    %v151 = vld [vmem:[%s1 + $0x2e8] sm:$0xff]
    %v152 = vld [vmem:[%s1 + $0x2f0] sm:$0xff]
    %v153 = vld [vmem:[%s1 + $0x2f8] sm:$0xff]
    %v154 = vpack.c.bf16 %v59, %v58
    %v155 = vpack.c.bf16 %v61, %v60
    %v156 = vpack.c.bf16 %v63, %v62
    %v157 = vpack.c.bf16 %v65, %v64
    %v158 = vpack.c.bf16 %v67, %v66
    %v159 = vpack.c.bf16 %v69, %v68
    %v160 = vpack.c.bf16 %v71, %v70
    %v161 = vpack.c.bf16 %v73, %v72
    %v162 = vpack.c.bf16 %v75, %v74
    %v163 = vpack.c.bf16 %v77, %v76
    %v164 = vpack.c.bf16 %v79, %v78
    %v165 = vpack.c.bf16 %v81, %v80
    %v166 = vpack.c.bf16 %v83, %v82
    %v167 = vpack.c.bf16 %v85, %v84
    %v168 = vpack.c.bf16 %v87, %v86
    %v169 = vpack.c.bf16 %v89, %v88
    %v170 = vpack.c.bf16 %v91, %v90
    %v171 = vpack.c.bf16 %v93, %v92
    %v172 = vpack.c.bf16 %v95, %v94
    %v173 = vpack.c.bf16 %v97, %v96
    %v174 = vpack.c.bf16 %v99, %v98
    %v175 = vpack.c.bf16 %v101, %v100
    %v176 = vpack.c.bf16 %v103, %v102
    %v177 = vpack.c.bf16 %v105, %v104
    %v178 = vpack.c.bf16 %v107, %v106
    %v179 = vpack.c.bf16 %v109, %v108
    %v180 = vpack.c.bf16 %v111, %v110
    %v181 = vpack.c.bf16 %v113, %v112
    %v182 = vpack.c.bf16 %v115, %v114
    %v183 = vpack.c.bf16 %v117, %v116
    %v184 = vpack.c.bf16 %v119, %v118
    %v185 = vpack.c.bf16 %v121, %v120
    %v186 = vpack.c.bf16 %v123, %v122
    %v187 = vpack.c.bf16 %v125, %v124
    %v188 = vpack.c.bf16 %v127, %v126
    %v189 = vpack.c.bf16 %v129, %v128
    %v190 = vpack.c.bf16 %v131, %v130
    %v191 = vpack.c.bf16 %v133, %v132
    %v192 = vpack.c.bf16 %v135, %v134
    %v193 = vpack.c.bf16 %v137, %v136
    %v194 = vpack.c.bf16 %v139, %v138
    %v195 = vpack.c.bf16 %v141, %v140
    %v196 = vpack.c.bf16 %v143, %v142
    %v197 = vpack.c.bf16 %v145, %v144
    %v198 = vpack.c.bf16 %v147, %v146
    %v199 = vpack.c.bf16 %v149, %v148
    %v200 = vpack.c.bf16 %v151, %v150
    %v201 = vpack.c.bf16 %v153, %v152
    %v202 = vld [vmem:[%s2] sm:$0x1]
    %v204 = vlaneseq
    %v205 = vshrl.u32 %v204, 7
    %v206 = vsub.s32 0, %v205
    %v207 = vrot.slane %v202, %v206
    %209 = vmatprep.subr.bf16.mxu0 0
    %210 = vmatpush1.bf16.msra.mxu0 %v161
    %211 = vmatprep.subr.bf16.mxu0 0
    %212 = vmatpush1.bf16.msra.mxu0 %v160
    %213 = vmatprep.subr.bf16.mxu0 0
    %214 = vmatpush1.bf16.msra.mxu0 %v159
    %215 = vmatprep.subr.bf16.mxu0 0
    %216 = vmatpush1.bf16.msra.mxu0 %v158
    %217 = vmatprep.subr.bf16.mxu0 0
    %218 = vmatpush1.bf16.msra.mxu0 %v157
    %219 = vmatprep.subr.bf16.mxu0 0
    %220 = vmatpush1.bf16.msra.mxu0 %v156
    %221 = vmatprep.subr.bf16.mxu0 0
    %222 = vmatpush1.bf16.msra.mxu0 %v155
    %223 = vmatprep.subr.bf16.mxu0 0
    %224 = vmatpush1.bf16.msra.mxu0 %v154
    %225 = vmatprep.subr.bf16.mxu0 0
    %226 = vmatpush2.bf16.msra.mxu0 %v169
    %227 = vmatprep.subr.bf16.mxu0 0
    %228 = vmatpush2.bf16.msra.mxu0 %v168
    %229 = vmatprep.subr.bf16.mxu0 0
    %230 = vmatpush2.bf16.msra.mxu0 %v167
    %231 = vmatprep.subr.bf16.mxu0 0
    %232 = vmatpush2.bf16.msra.mxu0 %v166
    %233 = vmatprep.subr.bf16.mxu0 0
    %234 = vmatpush2.bf16.msra.mxu0 %v165
    %235 = vmatprep.subr.bf16.mxu0 0
    %236 = vmatpush2.bf16.msra.mxu0 %v164
    %237 = vmatprep.subr.bf16.mxu0 0
    %238 = vmatpush2.bf16.msra.mxu0 %v163
    %239 = vmatprep.subr.bf16.mxu0 0
    %240 = vmatpush2.bf16.msra.mxu0 %v162
    %241 = vmatprep.mubr.bf16.mxu0 %v53
    %242 = vmatmul.mubr.bf16.gmra.mxu0 %v52
    %v243 = vpop.f32.mrf.mxu0
    %v244 = vadd.f32 %v207, %v243
    %v245 = vpop.f32.mrf.mxu0
    %v246 = vpop.f32.mrf.mxu0
    %v247 = vadd.f32 %v207, %v246
    %v248 = vpop.f32.mrf.mxu0
    %249 = vdwg.mxu0
    %250 = vmatprep.subr.bf16.mxu0 0
    %251 = vmatpush1.bf16.msra.mxu0 %v177
    %252 = vmatprep.subr.bf16.mxu0 0
    %253 = vmatpush1.bf16.msra.mxu0 %v176
    %254 = vmatprep.subr.bf16.mxu0 0
    %255 = vmatpush1.bf16.msra.mxu0 %v175
    %256 = vmatprep.subr.bf16.mxu0 0
    %257 = vmatpush1.bf16.msra.mxu0 %v174
    %258 = vmatprep.subr.bf16.mxu0 0
    %259 = vmatpush1.bf16.msra.mxu0 %v173
    %260 = vmatprep.subr.bf16.mxu0 0
    %261 = vmatpush1.bf16.msra.mxu0 %v172
    %262 = vmatprep.subr.bf16.mxu0 0
    %263 = vmatpush1.bf16.msra.mxu0 %v171
    %264 = vmatprep.subr.bf16.mxu0 0
    %265 = vmatpush1.bf16.msra.mxu0 %v170
    %266 = vmatprep.subr.bf16.mxu0 0
    %267 = vmatpush2.bf16.msra.mxu0 %v185
    %268 = vmatprep.subr.bf16.mxu0 0
    %269 = vmatpush2.bf16.msra.mxu0 %v184
    %270 = vmatprep.subr.bf16.mxu0 0
    %271 = vmatpush2.bf16.msra.mxu0 %v183
    %272 = vmatprep.subr.bf16.mxu0 0
    %273 = vmatpush2.bf16.msra.mxu0 %v182
    %274 = vmatprep.subr.bf16.mxu0 0
    %275 = vmatpush2.bf16.msra.mxu0 %v181
    %276 = vmatprep.subr.bf16.mxu0 0
    %277 = vmatpush2.bf16.msra.mxu0 %v180
    %278 = vmatprep.subr.bf16.mxu0 0
    %279 = vmatpush2.bf16.msra.mxu0 %v179
    %280 = vmatprep.subr.bf16.mxu0 0
    %281 = vmatpush2.bf16.msra.mxu0 %v178
    %282 = vmatprep.mubr.bf16.mxu0 %v55
    %283 = vmatmul.mubr.bf16.gmra.mxu0 %v54
    %v284 = vpop.f32.mrf.mxu0
    %v285 = vadd.f32 %v244, %v284
    %v286 = vpop.f32.mrf.mxu0
    %v287 = vpop.f32.mrf.mxu0
    %v288 = vadd.f32 %v247, %v287
    %v289 = vpop.f32.mrf.mxu0
    %290 = vdwg.mxu0
    %291 = vmatprep.subr.bf16.mxu0 0
    %292 = vmatpush1.bf16.msra.mxu0 %v193
    %293 = vmatprep.subr.bf16.mxu0 0
    %294 = vmatpush1.bf16.msra.mxu0 %v192
    %295 = vmatprep.subr.bf16.mxu0 0
    %296 = vmatpush1.bf16.msra.mxu0 %v191
    %297 = vmatprep.subr.bf16.mxu0 0
    %298 = vmatpush1.bf16.msra.mxu0 %v190
    %299 = vmatprep.subr.bf16.mxu0 0
    %300 = vmatpush1.bf16.msra.mxu0 %v189
    %301 = vmatprep.subr.bf16.mxu0 0
    %302 = vmatpush1.bf16.msra.mxu0 %v188
    %303 = vmatprep.subr.bf16.mxu0 0
    %304 = vmatpush1.bf16.msra.mxu0 %v187
    %305 = vmatprep.subr.bf16.mxu0 0
    %306 = vmatpush1.bf16.msra.mxu0 %v186
    %307 = vmatprep.subr.bf16.mxu0 0
    %308 = vmatpush2.bf16.msra.mxu0 %v201
    %309 = vmatprep.subr.bf16.mxu0 0
    %310 = vmatpush2.bf16.msra.mxu0 %v200
    %311 = vmatprep.subr.bf16.mxu0 0
    %312 = vmatpush2.bf16.msra.mxu0 %v199
    %313 = vmatprep.subr.bf16.mxu0 0
    %314 = vmatpush2.bf16.msra.mxu0 %v198
    %315 = vmatprep.subr.bf16.mxu0 0
    %316 = vmatpush2.bf16.msra.mxu0 %v197
    %317 = vmatprep.subr.bf16.mxu0 0
    %318 = vmatpush2.bf16.msra.mxu0 %v196
    %319 = vmatprep.subr.bf16.mxu0 0
    %320 = vmatpush2.bf16.msra.mxu0 %v195
    %321 = vmatprep.subr.bf16.mxu0 0
    %322 = vmatpush2.bf16.msra.mxu0 %v194
    %323 = vmatprep.mubr.bf16.mxu0 %v57
    %324 = vmatmul.mubr.bf16.gmra.mxu0 %v56
    %v325 = vpop.f32.mrf.mxu0
    %v326 = vadd.f32 %v285, %v325
    %v327 = vpop.f32.mrf.mxu0
    %v328 = vpop.f32.mrf.mxu0
    %v329 = vadd.f32 %v288, %v328
    %v330 = vpop.f32.mrf.mxu0
    %331 = vdwg.mxu0
    %v332 = vld [vmem:[%s3] sm:$0xff]
    %v333 = vld [vmem:[%s3 + $0x8] sm:$0xff]
    %v334 = vld [vmem:[%s3 + $0x10] sm:$0xff]
    %v335 = vld [vmem:[%s3 + $0x18] sm:$0xff]
    %v336 = vld [vmem:[%s5] sm:$0x1]
    %v338 = vlaneseq
    %v339 = vshrl.u32 %v338, 7
    %v340 = vsub.s32 0, %v339
    %v341 = vrot.slane %v336, %v340
    %vm343 = vcmask 261120
    %v345 = vsel %vm343, %v326, 0
    %347 = vmatprep.subr.mxu0 0.0
    %348 = vmatpush1.msra.mxu0 0.0
    %349 = vmatprep.subr.mxu0 0.0
    %350 = vmatpush1.msra.mxu0 0.0
    %351 = vmatprep.subr.mxu0 0.0
    %352 = vmatpush1.msra.mxu0 0.0
    %353 = vmatprep.subr.mxu0 0.0
    %354 = vmatpush1.msra.mxu0 0.0
    %355 = vmatprep.subr.mxu0 0.0
    %356 = vmatpush1.msra.mxu0 0.0
    %357 = vmatprep.subr.mxu0 0.0
    %358 = vmatpush1.msra.mxu0 0.0
    %359 = vmatprep.subr.mxu0 0.0
    %360 = vmatpush1.msra.mxu0 0.0
    %361 = vmatprep.subr.mxu0 0.0
    %362 = vmatpush1.msra.mxu0 0.0
    %363 = vmatprep.subr.mxu0 0.0
    %364 = vmatpush1.msra.mxu0 0.0
    %365 = vmatprep.subr.mxu0 0.0
    %366 = vmatpush1.msra.mxu0 0.0
    %367 = vmatprep.subr.mxu0 0.0
    %368 = vmatpush1.msra.mxu0 0.0
    %369 = vmatprep.subr.mxu0 0.0
    %370 = vmatpush1.msra.mxu0 0.0
    %371 = vmatprep.subr.mxu0 0.0
    %372 = vmatpush1.msra.mxu0 %v335
    %373 = vmatprep.subr.mxu0 0.0
    %374 = vmatpush1.msra.mxu0 %v334
    %375 = vmatprep.subr.mxu0 0.0
    %376 = vmatpush1.msra.mxu0 %v333
    %377 = vmatprep.subr.mxu0 0.0
    %378 = vmatpush1.msra.mxu0 %v332
    %379 = vmatprep.subr.mxu0 0.0
    %380 = vmatpush2.msra.mxu0 0.0
    %381 = vmatprep.subr.mxu0 0.0
    %382 = vmatpush2.msra.mxu0 0.0
    %383 = vmatprep.subr.mxu0 0.0
    %384 = vmatpush2.msra.mxu0 0.0
    %385 = vmatprep.subr.mxu0 0.0
    %386 = vmatpush2.msra.mxu0 0.0
    %387 = vmatprep.subr.mxu0 0.0
    %388 = vmatpush2.msra.mxu0 0.0
    %389 = vmatprep.subr.mxu0 0.0
    %390 = vmatpush2.msra.mxu0 0.0
    %391 = vmatprep.subr.mxu0 0.0
    %392 = vmatpush2.msra.mxu0 0.0
    %393 = vmatprep.subr.mxu0 0.0
    %394 = vmatpush2.msra.mxu0 0.0
    %395 = vmatprep.subr.mxu0 0.0
    %396 = vmatpush2.msra.mxu0 0.0
    %397 = vmatprep.subr.mxu0 0.0
    %398 = vmatpush2.msra.mxu0 0.0
    %399 = vmatprep.subr.mxu0 0.0
    %400 = vmatpush2.msra.mxu0 0.0
    %401 = vmatprep.subr.mxu0 0.0
    %402 = vmatpush2.msra.mxu0 0.0
    %403 = vmatprep.subr.mxu0 0.0
    %404 = vmatpush2.msra.mxu0 0.0
    %405 = vmatprep.subr.mxu0 0.0
    %406 = vmatpush2.msra.mxu0 0.0
    %407 = vmatprep.subr.mxu0 0.0
    %408 = vmatpush2.msra.mxu0 0.0
    %409 = vmatprep.subr.mxu0 0.0
    %410 = vmatpush2.msra.mxu0 0.0
    %411 = vmatprep.mubr.f32.mxu0 0.0
    %412 = vmatmul.mubr.f32.gmra.mxu0 %v345
    %v413 = vpop.f32.mrf.mxu0
    %v414 = vadd.f32 %v341, %v413
    %v415 = vpop.f32.mrf.mxu0
    %416 = vdwg.mxu0
    %v417 = vxor.u32 %v414, 2147483648
    %v418 = vmul.f32 %v417, 1.442695
    %v419 = vpow.pop %v418
    %v420 = vadd.f32 %v419, 1.0
    %v421 = vrcp.pop %v420
    %v422 = vmul.f32 1.0, %v421
    %v423 = vtanh.pop %v414
    %425 = vrot.lane.b32.xlu0 %v423, 64
    %v426 = vpop.permute.xlu0 %425
    %v428 = vmul.f32 %v422, %v426
    %v429 = vtanh.pop %v428
    %431 = vrot.lane.b32.xlu0 %v429, 96
    %v432 = vpop.permute.xlu0 %431
    %v434 = vmul.f32 %v422, %v432
    %v435 = vld [vmem:[%s6] sm:$0xff]
    %v436 = vld [vmem:[%s6 + $0x8] sm:$0xff]
    %v437 = vld [vmem:[%s6 + $0x10] sm:$0xff]
    %v438 = vld [vmem:[%s6 + $0x18] sm:$0xff]
    %v439 = vld [vmem:[%s8] sm:$0x1]
    %v441 = vlaneseq
    %v442 = vshrl.u32 %v441, 7
    %v443 = vsub.s32 0, %v442
    %v444 = vrot.slane %v439, %v443
    %v447 = vsel %vm343, %v329, 0
    %449 = vmatprep.subr.mxu0 0.0
    %450 = vmatpush1.msra.mxu0 0.0
    %451 = vmatprep.subr.mxu0 0.0
    %452 = vmatpush1.msra.mxu0 0.0
    %453 = vmatprep.subr.mxu0 0.0
    %454 = vmatpush1.msra.mxu0 0.0
    %455 = vmatprep.subr.mxu0 0.0
    %456 = vmatpush1.msra.mxu0 0.0
    %457 = vmatprep.subr.mxu0 0.0
    %458 = vmatpush1.msra.mxu0 0.0
    %459 = vmatprep.subr.mxu0 0.0
    %460 = vmatpush1.msra.mxu0 0.0
    %461 = vmatprep.subr.mxu0 0.0
    %462 = vmatpush1.msra.mxu0 0.0
    %463 = vmatprep.subr.mxu0 0.0
    %464 = vmatpush1.msra.mxu0 0.0
    %465 = vmatprep.subr.mxu0 0.0
    %466 = vmatpush1.msra.mxu0 0.0
    %467 = vmatprep.subr.mxu0 0.0
    %468 = vmatpush1.msra.mxu0 0.0
    %469 = vmatprep.subr.mxu0 0.0
    %470 = vmatpush1.msra.mxu0 0.0
    %471 = vmatprep.subr.mxu0 0.0
    %472 = vmatpush1.msra.mxu0 0.0
    %473 = vmatprep.subr.mxu0 0.0
    %474 = vmatpush1.msra.mxu0 %v438
    %475 = vmatprep.subr.mxu0 0.0
    %476 = vmatpush1.msra.mxu0 %v437
    %477 = vmatprep.subr.mxu0 0.0
    %478 = vmatpush1.msra.mxu0 %v436
    %479 = vmatprep.subr.mxu0 0.0
    %480 = vmatpush1.msra.mxu0 %v435
    %481 = vmatprep.subr.mxu0 0.0
    %482 = vmatpush2.msra.mxu0 0.0
    %483 = vmatprep.subr.mxu0 0.0
    %484 = vmatpush2.msra.mxu0 0.0
    %485 = vmatprep.subr.mxu0 0.0
    %486 = vmatpush2.msra.mxu0 0.0
    %487 = vmatprep.subr.mxu0 0.0
    %488 = vmatpush2.msra.mxu0 0.0
    %489 = vmatprep.subr.mxu0 0.0
    %490 = vmatpush2.msra.mxu0 0.0
    %491 = vmatprep.subr.mxu0 0.0
    %492 = vmatpush2.msra.mxu0 0.0
    %493 = vmatprep.subr.mxu0 0.0
    %494 = vmatpush2.msra.mxu0 0.0
    %495 = vmatprep.subr.mxu0 0.0
    %496 = vmatpush2.msra.mxu0 0.0
    %497 = vmatprep.subr.mxu0 0.0
    %498 = vmatpush2.msra.mxu0 0.0
    %499 = vmatprep.subr.mxu0 0.0
    %500 = vmatpush2.msra.mxu0 0.0
    %501 = vmatprep.subr.mxu0 0.0
    %502 = vmatpush2.msra.mxu0 0.0
    %503 = vmatprep.subr.mxu0 0.0
    %504 = vmatpush2.msra.mxu0 0.0
    %505 = vmatprep.subr.mxu0 0.0
    %506 = vmatpush2.msra.mxu0 0.0
    %507 = vmatprep.subr.mxu0 0.0
    %508 = vmatpush2.msra.mxu0 0.0
    %509 = vmatprep.subr.mxu0 0.0
    %510 = vmatpush2.msra.mxu0 0.0
    %511 = vmatprep.subr.mxu0 0.0
    %512 = vmatpush2.msra.mxu0 0.0
    %513 = vmatprep.mubr.f32.mxu0 0.0
    %514 = vmatmul.mubr.f32.gmra.mxu0 %v345
    %v515 = vpop.f32.mrf.mxu0
    %v516 = vadd.f32 %v444, %v515
    %v517 = vpop.f32.mrf.mxu0
    %518 = vmatprep.mubr.f32.mxu0 0.0
    %519 = vmatmul.mubr.f32.gmra.mxu0 %v447
    %v520 = vpop.f32.mrf.mxu0
    %v521 = vadd.f32 %v444, %v520
    %v522 = vpop.f32.mrf.mxu0
    %523 = vdwg.mxu0
    %v524 = vxor.u32 %v521, 2147483648
    %v525 = vmul.f32 %v524, 1.442695
    %v526 = vpow.pop %v525
    %v527 = vadd.f32 %v526, 1.0
    %v528 = vrcp.pop %v527
    %v529 = vmul.f32 1.0, %v528
    %v530 = vtanh.pop %v521
    %532 = vrot.lane.b32.xlu0 %v530, 64
    %v533 = vpop.permute.xlu0 %532
    %v535 = vmul.f32 %v529, %v533
    %v536 = vtanh.pop %v535
    %538 = vrot.lane.b32.xlu0 %v536, 96
    %v539 = vpop.permute.xlu0 %538
    %v541 = vmul.f32 %v529, %v539
    %v542 = vld [vmem:[%s7] sm:$0xff]
    %v543 = vld [vmem:[%s7 + $0x8] sm:$0xff]
    %v544 = vld [vmem:[%s7 + $0x10] sm:$0xff]
    %v545 = vld [vmem:[%s7 + $0x18] sm:$0xff]
    %v547 = vrot.slane %v541, 6
    %548 = vrot.lane.b32.xlu0 %v547, 32
    %v549 = vpop.permute.xlu0 %548
    %v550 = vsel %vm343, %v549, 0
    %552 = vmatprep.subr.mxu0 0.0
    %553 = vmatpush1.msra.mxu0 0.0
    %554 = vmatprep.subr.mxu0 0.0
    %555 = vmatpush1.msra.mxu0 0.0
    %556 = vmatprep.subr.mxu0 0.0
    %557 = vmatpush1.msra.mxu0 0.0
    %558 = vmatprep.subr.mxu0 0.0
    %559 = vmatpush1.msra.mxu0 0.0
    %560 = vmatprep.subr.mxu0 0.0
    %561 = vmatpush1.msra.mxu0 0.0
    %562 = vmatprep.subr.mxu0 0.0
    %563 = vmatpush1.msra.mxu0 0.0
    %564 = vmatprep.subr.mxu0 0.0
    %565 = vmatpush1.msra.mxu0 0.0
    %566 = vmatprep.subr.mxu0 0.0
    %567 = vmatpush1.msra.mxu0 0.0
    %568 = vmatprep.subr.mxu0 0.0
    %569 = vmatpush1.msra.mxu0 0.0
    %570 = vmatprep.subr.mxu0 0.0
    %571 = vmatpush1.msra.mxu0 0.0
    %572 = vmatprep.subr.mxu0 0.0
    %573 = vmatpush1.msra.mxu0 0.0
    %574 = vmatprep.subr.mxu0 0.0
    %575 = vmatpush1.msra.mxu0 0.0
    %576 = vmatprep.subr.mxu0 0.0
    %577 = vmatpush1.msra.mxu0 %v545
    %578 = vmatprep.subr.mxu0 0.0
    %579 = vmatpush1.msra.mxu0 %v544
    %580 = vmatprep.subr.mxu0 0.0
    %581 = vmatpush1.msra.mxu0 %v543
    %582 = vmatprep.subr.mxu0 0.0
    %583 = vmatpush1.msra.mxu0 %v542
    %584 = vmatprep.subr.mxu0 0.0
    %585 = vmatpush2.msra.mxu0 0.0
    %586 = vmatprep.subr.mxu0 0.0
    %587 = vmatpush2.msra.mxu0 0.0
    %588 = vmatprep.subr.mxu0 0.0
    %589 = vmatpush2.msra.mxu0 0.0
    %590 = vmatprep.subr.mxu0 0.0
    %591 = vmatpush2.msra.mxu0 0.0
    %592 = vmatprep.subr.mxu0 0.0
    %593 = vmatpush2.msra.mxu0 0.0
    %594 = vmatprep.subr.mxu0 0.0
    %595 = vmatpush2.msra.mxu0 0.0
    %596 = vmatprep.subr.mxu0 0.0
    %597 = vmatpush2.msra.mxu0 0.0
    %598 = vmatprep.subr.mxu0 0.0
    %599 = vmatpush2.msra.mxu0 0.0
    %600 = vmatprep.subr.mxu0 0.0
    %601 = vmatpush2.msra.mxu0 0.0
    %602 = vmatprep.subr.mxu0 0.0
    %603 = vmatpush2.msra.mxu0 0.0
    %604 = vmatprep.subr.mxu0 0.0
    %605 = vmatpush2.msra.mxu0 0.0
    %606 = vmatprep.subr.mxu0 0.0
    %607 = vmatpush2.msra.mxu0 0.0
    %608 = vmatprep.subr.mxu0 0.0
    %609 = vmatpush2.msra.mxu0 0.0
    %610 = vmatprep.subr.mxu0 0.0
    %611 = vmatpush2.msra.mxu0 0.0
    %612 = vmatprep.subr.mxu0 0.0
    %613 = vmatpush2.msra.mxu0 0.0
    %614 = vmatprep.subr.mxu0 0.0
    %615 = vmatpush2.msra.mxu0 0.0
    %616 = vmatprep.mubr.f32.mxu0 0.0
    %617 = vmatmul.mubr.f32.gmra.mxu0 %v550
    %v618 = vpop.f32.mrf.mxu0
    %v619 = vadd.f32 0.0, %v618
    %v620 = vpop.f32.mrf.mxu0
    %621 = vdwg.mxu0
    %v623 = vrot.slane %v619, 4
    %v625 = vadd.f32 %v521, %v623
    %v626 = vxor.u32 %v625, 2147483648
    %v627 = vmul.f32 %v626, 1.442695
    %v628 = vpow.pop %v627
    %v629 = vadd.f32 %v628, 1.0
    %v630 = vrcp.pop %v629
    %v631 = vmul.f32 1.0, %v630
    %v632 = vtanh.pop %v625
    %v634 = vrot.slane %v535, 2
    %635 = vrot.lane.b32.xlu0 %v634, 32
    %v636 = vpop.permute.xlu0 %635
    %v638 = vmul.f32 %v631, %v636
    %640 = vrot.lane.b32.xlu0 %v632, 64
    %v641 = vpop.permute.xlu0 %640
    %v643 = vmul.f32 %v631, %v641
    %645 = vrot.lane.b32.xlu0 %v643, 32
    %v646 = vpop.permute.xlu0 %645
    %v648 = vadd.f32 %v638, %v646
    %v649 = vtanh.pop %v648
    %651 = vrot.lane.b32.xlu0 %v649, 64
    %v652 = vpop.permute.xlu0 %651
    %v654 = vmul.f32 %v631, %v652
    %v656 = vrot.slane %v654, 4
    %657 = vrot.lane.b32.xlu0 %v656, 32
    %v658 = vpop.permute.xlu0 %657
    %v659 = vsel %vm343, %v658, 0
    %661 = vmatprep.subr.mxu0 0.0
    %662 = vmatpush1.msra.mxu0 0.0
    %663 = vmatprep.subr.mxu0 0.0
    %664 = vmatpush1.msra.mxu0 0.0
    %665 = vmatprep.subr.mxu0 0.0
    %666 = vmatpush1.msra.mxu0 0.0
    %667 = vmatprep.subr.mxu0 0.0
    %668 = vmatpush1.msra.mxu0 0.0
    %669 = vmatprep.subr.mxu0 0.0
    %670 = vmatpush1.msra.mxu0 0.0
    %671 = vmatprep.subr.mxu0 0.0
    %672 = vmatpush1.msra.mxu0 0.0
    %673 = vmatprep.subr.mxu0 0.0
    %674 = vmatpush1.msra.mxu0 0.0
    %675 = vmatprep.subr.mxu0 0.0
    %676 = vmatpush1.msra.mxu0 0.0
    %677 = vmatprep.subr.mxu0 0.0
    %678 = vmatpush1.msra.mxu0 0.0
    %679 = vmatprep.subr.mxu0 0.0
    %680 = vmatpush1.msra.mxu0 0.0
    %681 = vmatprep.subr.mxu0 0.0
    %682 = vmatpush1.msra.mxu0 0.0
    %683 = vmatprep.subr.mxu0 0.0
    %684 = vmatpush1.msra.mxu0 0.0
    %685 = vmatprep.subr.mxu0 0.0
    %686 = vmatpush1.msra.mxu0 %v545
    %687 = vmatprep.subr.mxu0 0.0
    %688 = vmatpush1.msra.mxu0 %v544
    %689 = vmatprep.subr.mxu0 0.0
    %690 = vmatpush1.msra.mxu0 %v543
    %691 = vmatprep.subr.mxu0 0.0
    %692 = vmatpush1.msra.mxu0 %v542
    %693 = vmatprep.subr.mxu0 0.0
    %694 = vmatpush2.msra.mxu0 0.0
    %695 = vmatprep.subr.mxu0 0.0
    %696 = vmatpush2.msra.mxu0 0.0
    %697 = vmatprep.subr.mxu0 0.0
    %698 = vmatpush2.msra.mxu0 0.0
    %699 = vmatprep.subr.mxu0 0.0
    %700 = vmatpush2.msra.mxu0 0.0
    %701 = vmatprep.subr.mxu0 0.0
    %702 = vmatpush2.msra.mxu0 0.0
    %703 = vmatprep.subr.mxu0 0.0
    %704 = vmatpush2.msra.mxu0 0.0
    %705 = vmatprep.subr.mxu0 0.0
    %706 = vmatpush2.msra.mxu0 0.0
    %707 = vmatprep.subr.mxu0 0.0
    %708 = vmatpush2.msra.mxu0 0.0
    %709 = vmatprep.subr.mxu0 0.0
    %710 = vmatpush2.msra.mxu0 0.0
    %711 = vmatprep.subr.mxu0 0.0
    %712 = vmatpush2.msra.mxu0 0.0
    %713 = vmatprep.subr.mxu0 0.0
    %714 = vmatpush2.msra.mxu0 0.0
    %715 = vmatprep.subr.mxu0 0.0
    %716 = vmatpush2.msra.mxu0 0.0
    %717 = vmatprep.subr.mxu0 0.0
    %718 = vmatpush2.msra.mxu0 0.0
    %719 = vmatprep.subr.mxu0 0.0
    %720 = vmatpush2.msra.mxu0 0.0
    %721 = vmatprep.subr.mxu0 0.0
    %722 = vmatpush2.msra.mxu0 0.0
    %723 = vmatprep.subr.mxu0 0.0
    %724 = vmatpush2.msra.mxu0 0.0
    %725 = vmatprep.mubr.f32.mxu0 0.0
    %726 = vmatmul.mubr.f32.gmra.mxu0 %v659
    %v727 = vpop.f32.mrf.mxu0
    %v728 = vadd.f32 0.0, %v727
    %v729 = vpop.f32.mrf.mxu0
    %730 = vdwg.mxu0
    %v732 = vrot.slane %v728, 6
    %v734 = vadd.f32 %v521, %v732
    %v735 = vxor.u32 %v734, 2147483648
    %v736 = vmul.f32 %v735, 1.442695
    %v737 = vpow.pop %v736
    %v738 = vadd.f32 %v737, 1.0
    %v739 = vrcp.pop %v738
    %v740 = vmul.f32 1.0, %v739
    %v741 = vtanh.pop %v734
    %v743 = vrot.slane %v648, 2
    %v745 = vmul.f32 %v740, %v743
    %747 = vrot.lane.b32.xlu0 %v741, 64
    %v748 = vpop.permute.xlu0 %747
    %v750 = vmul.f32 %v740, %v748
    %752 = vrot.lane.b32.xlu0 %v750, 32
    %v753 = vpop.permute.xlu0 %752
    %v755 = vadd.f32 %v745, %v753
    %v756 = vtanh.pop %v755
    %758 = vrot.lane.b32.xlu0 %v756, 64
    %v759 = vpop.permute.xlu0 %758
    %v761 = vmul.f32 %v740, %v759
    %v763 = vrot.slane %v761, 2
    %764 = vrot.lane.b32.xlu0 %v763, 32
    %v765 = vpop.permute.xlu0 %764
    %v766 = vsel %vm343, %v765, 0
    %768 = vmatprep.subr.mxu0 0.0
    %769 = vmatpush1.msra.mxu0 0.0
    %770 = vmatprep.subr.mxu0 0.0
    %771 = vmatpush1.msra.mxu0 0.0
    %772 = vmatprep.subr.mxu0 0.0
    %773 = vmatpush1.msra.mxu0 0.0
    %774 = vmatprep.subr.mxu0 0.0
    %775 = vmatpush1.msra.mxu0 0.0
    %776 = vmatprep.subr.mxu0 0.0
    %777 = vmatpush1.msra.mxu0 0.0
    %778 = vmatprep.subr.mxu0 0.0
    %779 = vmatpush1.msra.mxu0 0.0
    %780 = vmatprep.subr.mxu0 0.0
    %781 = vmatpush1.msra.mxu0 0.0
    %782 = vmatprep.subr.mxu0 0.0
    %783 = vmatpush1.msra.mxu0 0.0
    %784 = vmatprep.subr.mxu0 0.0
    %785 = vmatpush1.msra.mxu0 0.0
    %786 = vmatprep.subr.mxu0 0.0
    %787 = vmatpush1.msra.mxu0 0.0
    %788 = vmatprep.subr.mxu0 0.0
    %789 = vmatpush1.msra.mxu0 0.0
    %790 = vmatprep.subr.mxu0 0.0
    %791 = vmatpush1.msra.mxu0 0.0
    %792 = vmatprep.subr.mxu0 0.0
    %793 = vmatpush1.msra.mxu0 %v545
    %794 = vmatprep.subr.mxu0 0.0
    %795 = vmatpush1.msra.mxu0 %v544
    %796 = vmatprep.subr.mxu0 0.0
    %797 = vmatpush1.msra.mxu0 %v543
    %798 = vmatprep.subr.mxu0 0.0
    %799 = vmatpush1.msra.mxu0 %v542
    %800 = vmatprep.subr.mxu0 0.0
    %801 = vmatpush2.msra.mxu0 0.0
    %802 = vmatprep.subr.mxu0 0.0
    %803 = vmatpush2.msra.mxu0 0.0
    %804 = vmatprep.subr.mxu0 0.0
    %805 = vmatpush2.msra.mxu0 0.0
    %806 = vmatprep.subr.mxu0 0.0
    %807 = vmatpush2.msra.mxu0 0.0
    %808 = vmatprep.subr.mxu0 0.0
    %809 = vmatpush2.msra.mxu0 0.0
    %810 = vmatprep.subr.mxu0 0.0
    %811 = vmatpush2.msra.mxu0 0.0
    %812 = vmatprep.subr.mxu0 0.0
    %813 = vmatpush2.msra.mxu0 0.0
    %814 = vmatprep.subr.mxu0 0.0
    %815 = vmatpush2.msra.mxu0 0.0
    %816 = vmatprep.subr.mxu0 0.0
    %817 = vmatpush2.msra.mxu0 0.0
    %818 = vmatprep.subr.mxu0 0.0
    %819 = vmatpush2.msra.mxu0 0.0
    %820 = vmatprep.subr.mxu0 0.0
    %821 = vmatpush2.msra.mxu0 0.0
    %822 = vmatprep.subr.mxu0 0.0
    %823 = vmatpush2.msra.mxu0 0.0
    %824 = vmatprep.subr.mxu0 0.0
    %825 = vmatpush2.msra.mxu0 0.0
    %826 = vmatprep.subr.mxu0 0.0
    %827 = vmatpush2.msra.mxu0 0.0
    %828 = vmatprep.subr.mxu0 0.0
    %829 = vmatpush2.msra.mxu0 0.0
    %830 = vmatprep.subr.mxu0 0.0
    %831 = vmatpush2.msra.mxu0 0.0
    %832 = vmatprep.mubr.f32.mxu0 0.0
    %833 = vmatmul.mubr.f32.gmra.mxu0 %v766
    %v834 = vpop.f32.mrf.mxu0
    %v835 = vadd.f32 0.0, %v834
    %v836 = vpop.f32.mrf.mxu0
    %837 = vdwg.mxu0
    %v838 = vadd.f32 %v521, %v835
    %v839 = vxor.u32 %v838, 2147483648
    %v840 = vmul.f32 %v839, 1.442695
    %v841 = vpow.pop %v840
    %v842 = vadd.f32 %v841, 1.0
    %v843 = vrcp.pop %v842
    %v844 = vmul.f32 1.0, %v843
    %v845 = vtanh.pop %v838
    %v847 = vrot.slane %v755, 2
    %v849 = vmul.f32 %v844, %v847
    %851 = vrot.lane.b32.xlu0 %v845, 64
    %v852 = vpop.permute.xlu0 %851
    %v854 = vmul.f32 %v844, %v852
    %856 = vrot.lane.b32.xlu0 %v854, 32
    %v857 = vpop.permute.xlu0 %856
    %v859 = vadd.f32 %v849, %v857
    %v860 = vtanh.pop %v859
    %862 = vrot.lane.b32.xlu0 %v860, 64
    %v863 = vpop.permute.xlu0 %862
    %v865 = vmul.f32 %v844, %v863
    %867 = vrot.lane.b32.xlu0 %v865, 32
    %v868 = vpop.permute.xlu0 %867
    %v869 = vsel %vm343, %v868, 0
    %871 = vmatprep.subr.mxu0 0.0
    %872 = vmatpush1.msra.mxu0 0.0
    %873 = vmatprep.subr.mxu0 0.0
    %874 = vmatpush1.msra.mxu0 0.0
    %875 = vmatprep.subr.mxu0 0.0
    %876 = vmatpush1.msra.mxu0 0.0
    %877 = vmatprep.subr.mxu0 0.0
    %878 = vmatpush1.msra.mxu0 0.0
    %879 = vmatprep.subr.mxu0 0.0
    %880 = vmatpush1.msra.mxu0 0.0
    %881 = vmatprep.subr.mxu0 0.0
    %882 = vmatpush1.msra.mxu0 0.0
    %883 = vmatprep.subr.mxu0 0.0
    %884 = vmatpush1.msra.mxu0 0.0
    %885 = vmatprep.subr.mxu0 0.0
    %886 = vmatpush1.msra.mxu0 0.0
    %887 = vmatprep.subr.mxu0 0.0
    %888 = vmatpush1.msra.mxu0 0.0
    %889 = vmatprep.subr.mxu0 0.0
    %890 = vmatpush1.msra.mxu0 0.0
    %891 = vmatprep.subr.mxu0 0.0
    %892 = vmatpush1.msra.mxu0 0.0
    %893 = vmatprep.subr.mxu0 0.0
    %894 = vmatpush1.msra.mxu0 0.0
    %895 = vmatprep.subr.mxu0 0.0
    %896 = vmatpush1.msra.mxu0 %v545
    %897 = vmatprep.subr.mxu0 0.0
    %898 = vmatpush1.msra.mxu0 %v544
    %899 = vmatprep.subr.mxu0 0.0
    %900 = vmatpush1.msra.mxu0 %v543
    %901 = vmatprep.subr.mxu0 0.0
    %902 = vmatpush1.msra.mxu0 %v542
    %903 = vmatprep.subr.mxu0 0.0
    %904 = vmatpush2.msra.mxu0 0.0
    %905 = vmatprep.subr.mxu0 0.0
    %906 = vmatpush2.msra.mxu0 0.0
    %907 = vmatprep.subr.mxu0 0.0
    %908 = vmatpush2.msra.mxu0 0.0
    %909 = vmatprep.subr.mxu0 0.0
    %910 = vmatpush2.msra.mxu0 0.0
    %911 = vmatprep.subr.mxu0 0.0
    %912 = vmatpush2.msra.mxu0 0.0
    %913 = vmatprep.subr.mxu0 0.0
    %914 = vmatpush2.msra.mxu0 0.0
    %915 = vmatprep.subr.mxu0 0.0
    %916 = vmatpush2.msra.mxu0 0.0
    %917 = vmatprep.subr.mxu0 0.0
    %918 = vmatpush2.msra.mxu0 0.0
    %919 = vmatprep.subr.mxu0 0.0
    %920 = vmatpush2.msra.mxu0 0.0
    %921 = vmatprep.subr.mxu0 0.0
    %922 = vmatpush2.msra.mxu0 0.0
    %923 = vmatprep.subr.mxu0 0.0
    %924 = vmatpush2.msra.mxu0 0.0
    %925 = vmatprep.subr.mxu0 0.0
    %926 = vmatpush2.msra.mxu0 0.0
    %927 = vmatprep.subr.mxu0 0.0
    %928 = vmatpush2.msra.mxu0 0.0
    %929 = vmatprep.subr.mxu0 0.0
    %930 = vmatpush2.msra.mxu0 0.0
    %931 = vmatprep.subr.mxu0 0.0
    %932 = vmatpush2.msra.mxu0 0.0
    %933 = vmatprep.subr.mxu0 0.0
    %934 = vmatpush2.msra.mxu0 0.0
    %935 = vmatprep.mubr.f32.mxu0 0.0
    %936 = vmatmul.mubr.f32.gmra.mxu0 %v869
    %v937 = vpop.f32.mrf.mxu0
    %v938 = vadd.f32 0.0, %v937
    %v939 = vpop.f32.mrf.mxu0
    %940 = vdwg.mxu0
    %v942 = vrot.slane %v938, 2
    %v944 = vadd.f32 %v516, %v942
    %v945 = vxor.u32 %v944, 2147483648
    %v946 = vmul.f32 %v945, 1.442695
    %v947 = vpow.pop %v946
    %v948 = vadd.f32 %v947, 1.0
    %v949 = vrcp.pop %v948
    %v950 = vmul.f32 1.0, %v949
    %v951 = vtanh.pop %v944
    %v953 = vrot.slane %v859, 2
    %v955 = vmul.f32 %v950, %v953
    %957 = vrot.lane.b32.xlu0 %v951, 64
    %v958 = vpop.permute.xlu0 %957
    %v960 = vmul.f32 %v950, %v958
    %962 = vrot.lane.b32.xlu0 %v960, 32
    %v963 = vpop.permute.xlu0 %962
    %v965 = vadd.f32 %v955, %v963
    %v966 = vtanh.pop %v965
    %968 = vrot.lane.b32.xlu0 %v966, 64
    %v969 = vpop.permute.xlu0 %968
    %v971 = vmul.f32 %v950, %v969
    %v973 = vrot.slane %v971, 6
    %974 = vrot.lane.b32.xlu0 %v973, 32
    %v975 = vpop.permute.xlu0 %974
    %v976 = vsel %vm343, %v975, 0
    %978 = vmatprep.subr.mxu0 0.0
    %979 = vmatpush1.msra.mxu0 0.0
    %980 = vmatprep.subr.mxu0 0.0
    %981 = vmatpush1.msra.mxu0 0.0
    %982 = vmatprep.subr.mxu0 0.0
    %983 = vmatpush1.msra.mxu0 0.0
    %984 = vmatprep.subr.mxu0 0.0
    %985 = vmatpush1.msra.mxu0 0.0
    %986 = vmatprep.subr.mxu0 0.0
    %987 = vmatpush1.msra.mxu0 0.0
    %988 = vmatprep.subr.mxu0 0.0
    %989 = vmatpush1.msra.mxu0 0.0
    %990 = vmatprep.subr.mxu0 0.0
    %991 = vmatpush1.msra.mxu0 0.0
    %992 = vmatprep.subr.mxu0 0.0
    %993 = vmatpush1.msra.mxu0 0.0
    %994 = vmatprep.subr.mxu0 0.0
    %995 = vmatpush1.msra.mxu0 0.0
    %996 = vmatprep.subr.mxu0 0.0
    %997 = vmatpush1.msra.mxu0 0.0
    %998 = vmatprep.subr.mxu0 0.0
    %999 = vmatpush1.msra.mxu0 0.0
    %1000 = vmatprep.subr.mxu0 0.0
    %1001 = vmatpush1.msra.mxu0 0.0
    %1002 = vmatprep.subr.mxu0 0.0
    %1003 = vmatpush1.msra.mxu0 %v545
    %1004 = vmatprep.subr.mxu0 0.0
    %1005 = vmatpush1.msra.mxu0 %v544
    %1006 = vmatprep.subr.mxu0 0.0
    %1007 = vmatpush1.msra.mxu0 %v543
    %1008 = vmatprep.subr.mxu0 0.0
    %1009 = vmatpush1.msra.mxu0 %v542
    %1010 = vmatprep.subr.mxu0 0.0
    %1011 = vmatpush2.msra.mxu0 0.0
    %1012 = vmatprep.subr.mxu0 0.0
    %1013 = vmatpush2.msra.mxu0 0.0
    %1014 = vmatprep.subr.mxu0 0.0
    %1015 = vmatpush2.msra.mxu0 0.0
    %1016 = vmatprep.subr.mxu0 0.0
    %1017 = vmatpush2.msra.mxu0 0.0
    %1018 = vmatprep.subr.mxu0 0.0
    %1019 = vmatpush2.msra.mxu0 0.0
    %1020 = vmatprep.subr.mxu0 0.0
    %1021 = vmatpush2.msra.mxu0 0.0
    %1022 = vmatprep.subr.mxu0 0.0
    %1023 = vmatpush2.msra.mxu0 0.0
    %1024 = vmatprep.subr.mxu0 0.0
    %1025 = vmatpush2.msra.mxu0 0.0
    %1026 = vmatprep.subr.mxu0 0.0
    %1027 = vmatpush2.msra.mxu0 0.0
    %1028 = vmatprep.subr.mxu0 0.0
    %1029 = vmatpush2.msra.mxu0 0.0
    %1030 = vmatprep.subr.mxu0 0.0
    %1031 = vmatpush2.msra.mxu0 0.0
    %1032 = vmatprep.subr.mxu0 0.0
    %1033 = vmatpush2.msra.mxu0 0.0
    %1034 = vmatprep.subr.mxu0 0.0
    %1035 = vmatpush2.msra.mxu0 0.0
    %1036 = vmatprep.subr.mxu0 0.0
    %1037 = vmatpush2.msra.mxu0 0.0
    %1038 = vmatprep.subr.mxu0 0.0
    %1039 = vmatpush2.msra.mxu0 0.0
    %1040 = vmatprep.subr.mxu0 0.0
    %1041 = vmatpush2.msra.mxu0 0.0
    %1042 = vmatprep.mubr.f32.mxu0 0.0
    %1043 = vmatmul.mubr.f32.gmra.mxu0 %v976
    %v1044 = vpop.f32.mrf.mxu0
    %v1045 = vadd.f32 0.0, %v1044
    %v1046 = vpop.f32.mrf.mxu0
    %1047 = vdwg.mxu0
    %v1049 = vrot.slane %v1045, 4
    %v1051 = vadd.f32 %v516, %v1049
    %v1052 = vxor.u32 %v1051, 2147483648
    %v1053 = vmul.f32 %v1052, 1.442695
    %v1054 = vpow.pop %v1053
    %v1055 = vadd.f32 %v1054, 1.0
    %v1056 = vrcp.pop %v1055
    %v1057 = vmul.f32 1.0, %v1056
    %v1058 = vtanh.pop %v1051
    %v1060 = vrot.slane %v965, 2
    %v1062 = vmul.f32 %v1057, %v1060
    %1064 = vrot.lane.b32.xlu0 %v1058, 64
    %v1065 = vpop.permute.xlu0 %1064
    %v1067 = vmul.f32 %v1057, %v1065
    %1069 = vrot.lane.b32.xlu0 %v1067, 32
    %v1070 = vpop.permute.xlu0 %1069
    %v1072 = vadd.f32 %v1062, %v1070
    %v1073 = vtanh.pop %v1072
    %1075 = vrot.lane.b32.xlu0 %v1073, 64
    %v1076 = vpop.permute.xlu0 %1075
    %v1078 = vmul.f32 %v1057, %v1076
    %v1080 = vrot.slane %v1078, 4
    %1081 = vrot.lane.b32.xlu0 %v1080, 32
    %v1082 = vpop.permute.xlu0 %1081
    %v1083 = vsel %vm343, %v1082, 0
    %1085 = vmatprep.subr.mxu0 0.0
    %1086 = vmatpush1.msra.mxu0 0.0
    %1087 = vmatprep.subr.mxu0 0.0
    %1088 = vmatpush1.msra.mxu0 0.0
    %1089 = vmatprep.subr.mxu0 0.0
    %1090 = vmatpush1.msra.mxu0 0.0
    %1091 = vmatprep.subr.mxu0 0.0
    %1092 = vmatpush1.msra.mxu0 0.0
    %1093 = vmatprep.subr.mxu0 0.0
    %1094 = vmatpush1.msra.mxu0 0.0
    %1095 = vmatprep.subr.mxu0 0.0
    %1096 = vmatpush1.msra.mxu0 0.0
    %1097 = vmatprep.subr.mxu0 0.0
    %1098 = vmatpush1.msra.mxu0 0.0
    %1099 = vmatprep.subr.mxu0 0.0
    %1100 = vmatpush1.msra.mxu0 0.0
    %1101 = vmatprep.subr.mxu0 0.0
    %1102 = vmatpush1.msra.mxu0 0.0
    %1103 = vmatprep.subr.mxu0 0.0
    %1104 = vmatpush1.msra.mxu0 0.0
    %1105 = vmatprep.subr.mxu0 0.0
    %1106 = vmatpush1.msra.mxu0 0.0
    %1107 = vmatprep.subr.mxu0 0.0
    %1108 = vmatpush1.msra.mxu0 0.0
    %1109 = vmatprep.subr.mxu0 0.0
    %1110 = vmatpush1.msra.mxu0 %v545
    %1111 = vmatprep.subr.mxu0 0.0
    %1112 = vmatpush1.msra.mxu0 %v544
    %1113 = vmatprep.subr.mxu0 0.0
    %1114 = vmatpush1.msra.mxu0 %v543
    %1115 = vmatprep.subr.mxu0 0.0
    %1116 = vmatpush1.msra.mxu0 %v542
    %1117 = vmatprep.subr.mxu0 0.0
    %1118 = vmatpush2.msra.mxu0 0.0
    %1119 = vmatprep.subr.mxu0 0.0
    %1120 = vmatpush2.msra.mxu0 0.0
    %1121 = vmatprep.subr.mxu0 0.0
    %1122 = vmatpush2.msra.mxu0 0.0
    %1123 = vmatprep.subr.mxu0 0.0
    %1124 = vmatpush2.msra.mxu0 0.0
    %1125 = vmatprep.subr.mxu0 0.0
    %1126 = vmatpush2.msra.mxu0 0.0
    %1127 = vmatprep.subr.mxu0 0.0
    %1128 = vmatpush2.msra.mxu0 0.0
    %1129 = vmatprep.subr.mxu0 0.0
    %1130 = vmatpush2.msra.mxu0 0.0
    %1131 = vmatprep.subr.mxu0 0.0
    %1132 = vmatpush2.msra.mxu0 0.0
    %1133 = vmatprep.subr.mxu0 0.0
    %1134 = vmatpush2.msra.mxu0 0.0
    %1135 = vmatprep.subr.mxu0 0.0
    %1136 = vmatpush2.msra.mxu0 0.0
    %1137 = vmatprep.subr.mxu0 0.0
    %1138 = vmatpush2.msra.mxu0 0.0
    %1139 = vmatprep.subr.mxu0 0.0
    %1140 = vmatpush2.msra.mxu0 0.0
    %1141 = vmatprep.subr.mxu0 0.0
    %1142 = vmatpush2.msra.mxu0 0.0
    %1143 = vmatprep.subr.mxu0 0.0
    %1144 = vmatpush2.msra.mxu0 0.0
    %1145 = vmatprep.subr.mxu0 0.0
    %1146 = vmatpush2.msra.mxu0 0.0
    %1147 = vmatprep.subr.mxu0 0.0
    %1148 = vmatpush2.msra.mxu0 0.0
    %1149 = vmatprep.mubr.f32.mxu0 0.0
    %1150 = vmatmul.mubr.f32.gmra.mxu0 %v1083
    %v1151 = vpop.f32.mrf.mxu0
    %v1152 = vadd.f32 0.0, %v1151
    %v1153 = vpop.f32.mrf.mxu0
    %1154 = vdwg.mxu0
    %v1156 = vrot.slane %v1152, 6
    %v1158 = vadd.f32 %v516, %v1156
    %v1159 = vxor.u32 %v1158, 2147483648
    %v1160 = vmul.f32 %v1159, 1.442695
    %v1161 = vpow.pop %v1160
    %v1162 = vadd.f32 %v1161, 1.0
    %v1163 = vrcp.pop %v1162
    %v1164 = vmul.f32 1.0, %v1163
    %v1165 = vtanh.pop %v1158
    %v1167 = vrot.slane %v1072, 2
    %v1169 = vmul.f32 %v1164, %v1167
    %1171 = vrot.lane.b32.xlu0 %v1165, 64
    %v1172 = vpop.permute.xlu0 %1171
    %v1174 = vmul.f32 %v1164, %v1172
    %1176 = vrot.lane.b32.xlu0 %v1174, 32
    %v1177 = vpop.permute.xlu0 %1176
    %v1179 = vadd.f32 %v1169, %v1177
    %v1180 = vtanh.pop %v1179
    %1182 = vrot.lane.b32.xlu0 %v1180, 64
    %v1183 = vpop.permute.xlu0 %1182
    %v1185 = vmul.f32 %v1164, %v1183
    %v1187 = vrot.slane %v1185, 2
    %1188 = vrot.lane.b32.xlu0 %v1187, 32
    %v1189 = vpop.permute.xlu0 %1188
    %v1190 = vsel %vm343, %v1189, 0
    %1192 = vmatprep.subr.mxu0 0.0
    %1193 = vmatpush1.msra.mxu0 0.0
    %1194 = vmatprep.subr.mxu0 0.0
    %1195 = vmatpush1.msra.mxu0 0.0
    %1196 = vmatprep.subr.mxu0 0.0
    %1197 = vmatpush1.msra.mxu0 0.0
    %1198 = vmatprep.subr.mxu0 0.0
    %1199 = vmatpush1.msra.mxu0 0.0
    %1200 = vmatprep.subr.mxu0 0.0
    %1201 = vmatpush1.msra.mxu0 0.0
    %1202 = vmatprep.subr.mxu0 0.0
    %1203 = vmatpush1.msra.mxu0 0.0
    %1204 = vmatprep.subr.mxu0 0.0
    %1205 = vmatpush1.msra.mxu0 0.0
    %1206 = vmatprep.subr.mxu0 0.0
    %1207 = vmatpush1.msra.mxu0 0.0
    %1208 = vmatprep.subr.mxu0 0.0
    %1209 = vmatpush1.msra.mxu0 0.0
    %1210 = vmatprep.subr.mxu0 0.0
    %1211 = vmatpush1.msra.mxu0 0.0
    %1212 = vmatprep.subr.mxu0 0.0
    %1213 = vmatpush1.msra.mxu0 0.0
    %1214 = vmatprep.subr.mxu0 0.0
    %1215 = vmatpush1.msra.mxu0 0.0
    %1216 = vmatprep.subr.mxu0 0.0
    %1217 = vmatpush1.msra.mxu0 %v545
    %1218 = vmatprep.subr.mxu0 0.0
    %1219 = vmatpush1.msra.mxu0 %v544
    %1220 = vmatprep.subr.mxu0 0.0
    %1221 = vmatpush1.msra.mxu0 %v543
    %1222 = vmatprep.subr.mxu0 0.0
    %1223 = vmatpush1.msra.mxu0 %v542
    %1224 = vmatprep.subr.mxu0 0.0
    %1225 = vmatpush2.msra.mxu0 0.0
    %1226 = vmatprep.subr.mxu0 0.0
    %1227 = vmatpush2.msra.mxu0 0.0
    %1228 = vmatprep.subr.mxu0 0.0
    %1229 = vmatpush2.msra.mxu0 0.0
    %1230 = vmatprep.subr.mxu0 0.0
    %1231 = vmatpush2.msra.mxu0 0.0
    %1232 = vmatprep.subr.mxu0 0.0
    %1233 = vmatpush2.msra.mxu0 0.0
    %1234 = vmatprep.subr.mxu0 0.0
    %1235 = vmatpush2.msra.mxu0 0.0
    %1236 = vmatprep.subr.mxu0 0.0
    %1237 = vmatpush2.msra.mxu0 0.0
    %1238 = vmatprep.subr.mxu0 0.0
    %1239 = vmatpush2.msra.mxu0 0.0
    %1240 = vmatprep.subr.mxu0 0.0
    %1241 = vmatpush2.msra.mxu0 0.0
    %1242 = vmatprep.subr.mxu0 0.0
    %1243 = vmatpush2.msra.mxu0 0.0
    %1244 = vmatprep.subr.mxu0 0.0
    %1245 = vmatpush2.msra.mxu0 0.0
    %1246 = vmatprep.subr.mxu0 0.0
    %1247 = vmatpush2.msra.mxu0 0.0
    %1248 = vmatprep.subr.mxu0 0.0
    %1249 = vmatpush2.msra.mxu0 0.0
    %1250 = vmatprep.subr.mxu0 0.0
    %1251 = vmatpush2.msra.mxu0 0.0
    %1252 = vmatprep.subr.mxu0 0.0
    %1253 = vmatpush2.msra.mxu0 0.0
    %1254 = vmatprep.subr.mxu0 0.0
    %1255 = vmatpush2.msra.mxu0 0.0
    %1256 = vmatprep.mubr.f32.mxu0 0.0
    %1257 = vmatmul.mubr.f32.gmra.mxu0 %v1190
    %v1258 = vpop.f32.mrf.mxu0
    %v1259 = vadd.f32 0.0, %v1258
    %v1260 = vpop.f32.mrf.mxu0
    %1261 = vdwg.mxu0
    %v1262 = vadd.f32 %v516, %v1259
    %v1263 = vxor.u32 %v1262, 2147483648
    %v1264 = vmul.f32 %v1263, 1.442695
    %v1265 = vpow.pop %v1264
    %v1266 = vadd.f32 %v1265, 1.0
    %v1267 = vrcp.pop %v1266
    %v1268 = vmul.f32 1.0, %v1267
    %v1269 = vtanh.pop %v1262
    %v1271 = vrot.slane %v1179, 2
    %v1273 = vmul.f32 %v1268, %v1271
    %1275 = vrot.lane.b32.xlu0 %v1269, 64
    %v1276 = vpop.permute.xlu0 %1275
    %v1278 = vmul.f32 %v1268, %v1276
    %1280 = vrot.lane.b32.xlu0 %v1278, 32
    %v1281 = vpop.permute.xlu0 %1280
    %v1283 = vadd.f32 %v1273, %v1281
    %v1284 = vtanh.pop %v1283
    %1286 = vrot.lane.b32.xlu0 %v1284, 64
    %v1287 = vpop.permute.xlu0 %1286
    %v1289 = vmul.f32 %v1268, %v1287
    %v1290 = vld [vmem:[%s9] sm:$0xff]
    %v1291 = vld [vmem:[%s9 + $0x8] sm:$0xff]
    %v1292 = vld [vmem:[%s9 + $0x10] sm:$0xff]
    %v1293 = vld [vmem:[%s9 + $0x18] sm:$0xff]
    %v1294 = vld [vmem:[%s9 + $0x20] sm:$0xff]
    %v1295 = vld [vmem:[%s9 + $0x28] sm:$0xff]
    %v1296 = vld [vmem:[%s9 + $0x30] sm:$0xff]
    %v1297 = vld [vmem:[%s9 + $0x38] sm:$0xff]
    %1299 = vrot.lane.b32.xlu0 %v1289, 32
    %v1300 = vpop.permute.xlu0 %1299
    %v1301 = vsel %vm343, %v1300, 0
    %1303 = vmatprep.subr.mxu0 0.0
    %1304 = vmatpush1.msra.mxu0 0.0
    %1305 = vmatprep.subr.mxu0 0.0
    %1306 = vmatpush1.msra.mxu0 0.0
    %1307 = vmatprep.subr.mxu0 0.0
    %1308 = vmatpush1.msra.mxu0 0.0
    %1309 = vmatprep.subr.mxu0 0.0
    %1310 = vmatpush1.msra.mxu0 0.0
    %1311 = vmatprep.subr.mxu0 0.0
    %1312 = vmatpush1.msra.mxu0 0.0
    %1313 = vmatprep.subr.mxu0 0.0
    %1314 = vmatpush1.msra.mxu0 0.0
    %1315 = vmatprep.subr.mxu0 0.0
    %1316 = vmatpush1.msra.mxu0 0.0
    %1317 = vmatprep.subr.mxu0 0.0
    %1318 = vmatpush1.msra.mxu0 0.0
    %1319 = vmatprep.subr.mxu0 0.0
    %1320 = vmatpush1.msra.mxu0 0.0
    %1321 = vmatprep.subr.mxu0 0.0
    %1322 = vmatpush1.msra.mxu0 0.0
    %1323 = vmatprep.subr.mxu0 0.0
    %1324 = vmatpush1.msra.mxu0 0.0
    %1325 = vmatprep.subr.mxu0 0.0
    %1326 = vmatpush1.msra.mxu0 0.0
    %1327 = vmatprep.subr.mxu0 0.0
    %1328 = vmatpush1.msra.mxu0 %v1297
    %1329 = vmatprep.subr.mxu0 0.0
    %1330 = vmatpush1.msra.mxu0 %v1296
    %1331 = vmatprep.subr.mxu0 0.0
    %1332 = vmatpush1.msra.mxu0 %v1295
    %1333 = vmatprep.subr.mxu0 0.0
    %1334 = vmatpush1.msra.mxu0 %v1294
    %1335 = vmatprep.subr.mxu0 0.0
    %1336 = vmatpush2.msra.mxu0 0.0
    %1337 = vmatprep.subr.mxu0 0.0
    %1338 = vmatpush2.msra.mxu0 0.0
    %1339 = vmatprep.subr.mxu0 0.0
    %1340 = vmatpush2.msra.mxu0 0.0
    %1341 = vmatprep.subr.mxu0 0.0
    %1342 = vmatpush2.msra.mxu0 0.0
    %1343 = vmatprep.subr.mxu0 0.0
    %1344 = vmatpush2.msra.mxu0 0.0
    %1345 = vmatprep.subr.mxu0 0.0
    %1346 = vmatpush2.msra.mxu0 0.0
    %1347 = vmatprep.subr.mxu0 0.0
    %1348 = vmatpush2.msra.mxu0 0.0
    %1349 = vmatprep.subr.mxu0 0.0
    %1350 = vmatpush2.msra.mxu0 0.0
    %1351 = vmatprep.subr.mxu0 0.0
    %1352 = vmatpush2.msra.mxu0 0.0
    %1353 = vmatprep.subr.mxu0 0.0
    %1354 = vmatpush2.msra.mxu0 0.0
    %1355 = vmatprep.subr.mxu0 0.0
    %1356 = vmatpush2.msra.mxu0 0.0
    %1357 = vmatprep.subr.mxu0 0.0
    %1358 = vmatpush2.msra.mxu0 0.0
    %1359 = vmatprep.subr.mxu0 0.0
    %1360 = vmatpush2.msra.mxu0 0.0
    %1361 = vmatprep.subr.mxu0 0.0
    %1362 = vmatpush2.msra.mxu0 0.0
    %1363 = vmatprep.subr.mxu0 0.0
    %1364 = vmatpush2.msra.mxu0 0.0
    %1365 = vmatprep.subr.mxu0 0.0
    %1366 = vmatpush2.msra.mxu0 0.0
    %1367 = vmatprep.mubr.f32.mxu0 0.0
    %1368 = vmatmul.mubr.f32.gmra.mxu0 %v1301
    %v1369 = vpop.f32.mrf.mxu0
    %v1370 = vadd.f32 0.0, %v1369
    %v1371 = vpop.f32.mrf.mxu0
    %1372 = vdwg.mxu0
    %1374 = vrot.lane.b32.xlu0 %v434, 32
    %v1375 = vpop.permute.xlu0 %1374
    %v1376 = vsel %vm343, %v1375, 0
    %1378 = vmatprep.subr.mxu0 0.0
    %1379 = vmatpush1.msra.mxu0 0.0
    %1380 = vmatprep.subr.mxu0 0.0
    %1381 = vmatpush1.msra.mxu0 0.0
    %1382 = vmatprep.subr.mxu0 0.0
    %1383 = vmatpush1.msra.mxu0 0.0
    %1384 = vmatprep.subr.mxu0 0.0
    %1385 = vmatpush1.msra.mxu0 0.0
    %1386 = vmatprep.subr.mxu0 0.0
    %1387 = vmatpush1.msra.mxu0 0.0
    %1388 = vmatprep.subr.mxu0 0.0
    %1389 = vmatpush1.msra.mxu0 0.0
    %1390 = vmatprep.subr.mxu0 0.0
    %1391 = vmatpush1.msra.mxu0 0.0
    %1392 = vmatprep.subr.mxu0 0.0
    %1393 = vmatpush1.msra.mxu0 0.0
    %1394 = vmatprep.subr.mxu0 0.0
    %1395 = vmatpush1.msra.mxu0 0.0
    %1396 = vmatprep.subr.mxu0 0.0
    %1397 = vmatpush1.msra.mxu0 0.0
    %1398 = vmatprep.subr.mxu0 0.0
    %1399 = vmatpush1.msra.mxu0 0.0
    %1400 = vmatprep.subr.mxu0 0.0
    %1401 = vmatpush1.msra.mxu0 0.0
    %1402 = vmatprep.subr.mxu0 0.0
    %1403 = vmatpush1.msra.mxu0 %v1293
    %1404 = vmatprep.subr.mxu0 0.0
    %1405 = vmatpush1.msra.mxu0 %v1292
    %1406 = vmatprep.subr.mxu0 0.0
    %1407 = vmatpush1.msra.mxu0 %v1291
    %1408 = vmatprep.subr.mxu0 0.0
    %1409 = vmatpush1.msra.mxu0 %v1290
    %1410 = vmatprep.subr.mxu0 0.0
    %1411 = vmatpush2.msra.mxu0 0.0
    %1412 = vmatprep.subr.mxu0 0.0
    %1413 = vmatpush2.msra.mxu0 0.0
    %1414 = vmatprep.subr.mxu0 0.0
    %1415 = vmatpush2.msra.mxu0 0.0
    %1416 = vmatprep.subr.mxu0 0.0
    %1417 = vmatpush2.msra.mxu0 0.0
    %1418 = vmatprep.subr.mxu0 0.0
    %1419 = vmatpush2.msra.mxu0 0.0
    %1420 = vmatprep.subr.mxu0 0.0
    %1421 = vmatpush2.msra.mxu0 0.0
    %1422 = vmatprep.subr.mxu0 0.0
    %1423 = vmatpush2.msra.mxu0 0.0
    %1424 = vmatprep.subr.mxu0 0.0
    %1425 = vmatpush2.msra.mxu0 0.0
    %1426 = vmatprep.subr.mxu0 0.0
    %1427 = vmatpush2.msra.mxu0 0.0
    %1428 = vmatprep.subr.mxu0 0.0
    %1429 = vmatpush2.msra.mxu0 0.0
    %1430 = vmatprep.subr.mxu0 0.0
    %1431 = vmatpush2.msra.mxu0 0.0
    %1432 = vmatprep.subr.mxu0 0.0
    %1433 = vmatpush2.msra.mxu0 0.0
    %1434 = vmatprep.subr.mxu0 0.0
    %1435 = vmatpush2.msra.mxu0 0.0
    %1436 = vmatprep.subr.mxu0 0.0
    %1437 = vmatpush2.msra.mxu0 0.0
    %1438 = vmatprep.subr.mxu0 0.0
    %1439 = vmatpush2.msra.mxu0 0.0
    %1440 = vmatprep.subr.mxu0 0.0
    %1441 = vmatpush2.msra.mxu0 0.0
    %1442 = vmatprep.mubr.f32.mxu0 0.0
    %1443 = vmatmul.mubr.f32.gmra.mxu0 %v1376
    %v1444 = vpop.f32.mrf.mxu0
    %v1445 = vadd.f32 %v1370, %v1444
    %v1446 = vpop.f32.mrf.mxu0
    %1447 = vdwg.mxu0
    %v1448 = vld [vmem:[%s10] sm:$0x1]
    %v1450 = vlaneseq
    %v1451 = vshrl.u32 %v1450, 7
    %v1452 = vsub.s32 0, %v1451
    %v1453 = vrot.slane %v1448, %v1452
    %v1455 = vadd.f32 %v1445, %v1453
    %vm1456 = vcmask 9216
    %v1457 = vsel %vm1456, %v1455, -inf
    %1458 = vmax.xlane.f32.xlu0 %v1457
    %v1459 = vpop.xlane.xlu0 %1458
    %v1460 = vsub.f32 %v1455, %v1459
    %v1461 = vmul.f32 %v1460, 1.442695
    %v1462 = vpow.pop %v1461
    %v1463 = vsel %vm1456, %v1462, 0.0
    %1464 = vadd.xlane.f32.xlu0 %v1463
    %v1465 = vpop.xlane.xlu0 %1464
    %v1466 = vlog2.pop %v1465
    %v1467 = vmul.f32 %v1466, 0.6931472
    %v1468 = vsub.f32 %v1460, %v1467
    %1469 = vst.msk [vmem:[#allocation2] sm:$0x3] %vm1456, %v1468
    // Predicated region
    $region46: #{tpu_custom_call.1} parent=1 // pred_check
      _
    $region47: #{tpu_custom_call.1} parent=1 // pred_check_branch
      %1471 = sbr.rel (0) target = $region49
    $region48: #{tpu_custom_call.1} parent=1 // pred_region
      %s1473 = ssub.s32 32, 32
      %1474 = vsyncadd [#allocation3], %s1473
      %s1476 = sshll.u32 [#allocation2], 4
      %s1477 = int_to_ptr.vmem [resolvable:$true] %s1476
      %1479 = dma.vmem_to_hbm [thread:$0]  %s1477, 32, %s11, [#allocation3]
    $region49: #{tpu_custom_call.1} parent=1 // pred_fallthru
      _
    // Predicated region
    $region50: #{tpu_custom_call.1} parent=1 // pred_check
      _
    $region51: #{tpu_custom_call.1} parent=1 // pred_check_branch
      %1481 = sbr.rel (0) target = $region53
    $region52: #{tpu_custom_call.1} parent=1 // pred_region
      %1482 = dma.done [#allocation3], 32
    $region53: #{tpu_custom_call.1} parent=1 // pred_fallthru
      _
    %1483 = vsyncpa [#allocation3], 1

</llo_original>
